<compile_context>
chip_gen: v7x
topology: tpu7x:2x2x1
jax: 0.10.0
libtpu: 0.0.40
codegen_flags: <defaults>
</compile_context>

<pallas_src>
import functools

import jax
import jax.numpy as jnp
from jax import lax
from jax.experimental import pallas as pl
from jax.experimental.pallas import tpu as pltpu


def _banded_weights(w_hwio, W):
    """Pack a (kh, kw, Cin, Cout) filter into kh banded matrices.

    Returns B of shape (kh, W*Cin, W*Cout) such that, on lane-dense (rows, W*C)
    activation slabs,
        out_row[y, :] = sum_dy  in_row[y + dy - 1, :] @ B[dy]
    is the 2-D 'SAME' convolution:  B[dy, xin*Cin + ci, x*Cout + co] = w[dy, dx, ci, co]
    with xin = x + dx - 1 restricted to [0, W).  Taps that would read the zero halo in
    the W direction are simply omitted, so the contraction needs no lane padding
    (K = W*Cin exactly, fully lane-aligned for W*Cin = 128).

    NOTE: K = W*Cin dense vs. 3*Cin useful taps => ~W/3 MXU-FLOP inflation per conv.
    Acceptable while the kernel is overhead/DMA bound at these sizes.
    TODO(synk): tile W (narrower band per matmul) or switch to a per-dy K=3*Cin packing
    if larger W/C ever make this kernel MXU-bound.
    """
    kh, kw, Cin, Cout = w_hwio.shape
    xin = jnp.arange(W)[:, None, None]
    x = jnp.arange(W)[None, None, :]
    dx = jnp.arange(kw)[None, :, None]
    sel = (xin == x + dx - (kw // 2)).astype(w_hwio.dtype)      # (W, kw, W)
    b = jnp.einsum('pdw,ydio->ypiwo', sel, w_hwio)              # (kh, W, Cin, W, Cout)
    return b.reshape(kh, W * Cin, W * Cout)


def _residual_block_kernel(x_ref, wb1_ref, b1_ref, wb2_ref, b2_ref, o_ref, *, H):
    cd = wb1_ref.dtype                      # MXU operand dtype (bf16 by default)
    M = x_ref.shape[0]                      # block_batch * H rows per step

    x_res = x_ref[...]                      # original precision -> used for skip add
    xv = x_res.astype(cd)                   # MXU operand copy

    # Per-row masks: does this row have a valid neighbour above / below within the
    # same image?  (Images are stacked every H rows inside the slab.)
    y = lax.rem(lax.broadcasted_iota(jnp.int32, (M, 1), 0), H)
    has_up = y > 0
    has_dn = y < (H - 1)

    def row_shifted(v):
        """(row y-1, row y+1) views of v, zeroed across image boundaries (zero pad)."""
        zr = jnp.zeros((1, v.shape[-1]), v.dtype)
        up = jnp.where(has_up, jnp.concatenate([zr, v[:-1, :]], axis=0),
                       jnp.zeros_like(v))
        dn = jnp.where(has_dn, jnp.concatenate([v[1:, :], zr], axis=0),
                       jnp.zeros_like(v))
        return up, dn

    def conv_relu(v, wb_ref, b_ref):
        # Sublane shifts here are the only non-aligned vector work left; they ride the
        # XLU/VPU slots and are off the MXU critical path at these sizes.
        v_up, v_dn = row_shifted(v)
        acc = jnp.dot(v_up, wb_ref[0], preferred_element_type=jnp.float32)
        acc += jnp.dot(v, wb_ref[1], preferred_element_type=jnp.float32)
        acc += jnp.dot(v_dn, wb_ref[2], preferred_element_type=jnp.float32)
        return jnp.maximum(acc + b_ref[...], 0.0)               # f32 (M, W*Cout)

    h = conv_relu(xv, wb1_ref, b1_ref)
    out = conv_relu(h.astype(cd), wb2_ref, b2_ref)
    out = out + x_res.astype(jnp.float32)                       # residual add in f32
    o_ref[...] = out.astype(o_ref.dtype)                        # lane-dense, unmasked


def _pick_block_batch(n, h, target_rows=128):
    """Largest divisor of n with block_batch*h <= target_rows (at least 1).

    target_rows=128 fills a v5e MXU tile; on v6e/v7x pass block_batch explicitly to
    target 256 rows when n allows.  On v7x prefer keeping the resulting grid length
    even so both TensorCores get work under dimension_semantics=("parallel",).
    """
    best = 1
    for d in range(1, n + 1):
        if n % d == 0 and d * h <= target_rows:
            best = d
    return best


def residual_block_pallas_slab(x_slab, w1_oihw, b1, w2_oihw, b2, *,
                               batch, height, width,
                               compute_dtype=jnp.bfloat16, out_dtype=None,
                               block_batch=None):
    """ResidualBlock forward on a lane-dense activation slab.

    x_slab: (batch*height, width*Cin) -- NHWC flattened so rows index (n, y) and lanes
            index (x, c); this is the layout the kernel reads and writes directly.
    Returns a slab of shape (batch*height, width*Cout).
    """
    N, H, W = batch, height, width
    Cout, Cin, kh, kw = w1_oihw.shape
    assert (kh, kw) == (3, 3)
    assert Cin == Cout, "residual add requires in_planes == c_size"
    assert x_slab.shape == (N * H, W * Cin)
    if out_dtype is None:
        out_dtype = x_slab.dtype
    if block_batch is None:
        block_batch = _pick_block_batch(N, H)
    assert N % block_batch == 0
    M = block_batch * H

    def prep_w(w_oihw):
        w_hwio = jnp.transpose(w_oihw, (2, 3, 1, 0)).astype(jnp.float32)
        return _banded_weights(w_hwio, W).astype(compute_dtype)

    wb1 = prep_w(w1_oihw)                                   # (3, W*Cin,  W*Cout)
    wb2 = prep_w(w2_oihw)                                   # (3, W*Cout, W*Cout)
    b1r = jnp.tile(b1.astype(jnp.float32), W).reshape(1, W * Cout)
    b2r = jnp.tile(b2.astype(jnp.float32), W).reshape(1, W * Cout)

    kernel = functools.partial(_residual_block_kernel, H=H)

    # Per-step VMEM: double-buffered x/out blocks + both banded weights, well under
    # 1 MiB here -- far below v7x's 64 MiB.  TODO(synk): for much larger H*W*C add a
    # second grid axis over H row-tiles (1-row halo) to keep the footprint bounded.
    return pl.pallas_call(
        kernel,
        out_shape=jax.ShapeDtypeStruct((N * H, W * Cout), out_dtype),
        grid_spec=pltpu.PrefetchScalarGridSpec(
            num_scalar_prefetch=0,
            grid=(N // block_batch,),
            in_specs=[
                pl.BlockSpec((M, W * Cin), lambda i: (i, 0)),
                pl.BlockSpec((3, W * Cin, W * Cout), lambda i: (0, 0, 0)),
                pl.BlockSpec((1, W * Cout), lambda i: (0, 0)),
                pl.BlockSpec((3, W * Cout, W * Cout), lambda i: (0, 0, 0)),
                pl.BlockSpec((1, W * Cout), lambda i: (0, 0)),
            ],
            out_specs=pl.BlockSpec((M, W * Cout), lambda i: (i, 0)),
        ),
        compiler_params=pltpu.CompilerParams(
            dimension_semantics=("parallel",),   # batch tiles shard across TCs on v7x
            vmem_limit_bytes=32 * 1024 * 1024,
        ),
    )(x_slab, wb1, b1r, wb2, b2r)


def residual_block_pallas(x_nchw, w1_oihw, b1, w2_oihw, b2, *,
                          compute_dtype=jnp.bfloat16, out_dtype=None, block_batch=None):
    """PyTorch-layout wrapper: (N, Cin, H, W) float -> (N, Cout, H, W)."""
    N, Cin, H, W = x_nchw.shape
    Cout = w1_oihw.shape[0]
    if out_dtype is None:
        out_dtype = x_nchw.dtype
    # TODO(synk): these two transposes are extra HBM round trips executed by XLA; if
    # the surrounding model keeps activations in the NHWC / (N*H, W*C) slab layout,
    # call residual_block_pallas_slab directly and they disappear.
    x_slab = jnp.transpose(x_nchw, (0, 2, 3, 1)).reshape(N * H, W * Cin)
    out_slab = residual_block_pallas_slab(
        x_slab, w1_oihw, b1, w2_oihw, b2, batch=N, height=H, width=W,
        compute_dtype=compute_dtype, out_dtype=out_dtype, block_batch=block_batch)
    return jnp.transpose(out_slab.reshape(N, H, W, Cout), (0, 3, 1, 2))


def residual_block_reference(x_nchw, w1_oihw, b1, w2_oihw, b2, *, emulate_bf16=False):
    """Pure-JAX reference mirroring the PyTorch module.

    With emulate_bf16=True the conv operands (x, weights, intermediate h) are rounded
    to bf16 (matching the kernel's bf16 MXU operands with f32 accumulation); the skip
    connection always uses the original input, as in the kernel.
    """
    f32 = jnp.float32

    def q(a):
        return a.astype(jnp.bfloat16).astype(f32) if emulate_bf16 else a.astype(f32)

    xq, w1q, w2q = q(x_nchw), q(w1_oihw), q(w2_oihw)
    dn = lax.conv_dimension_numbers(xq.shape, w1q.shape, ("NCHW", "OIHW", "NCHW"))
    h = lax.conv_general_dilated(xq, w1q, (1, 1), "SAME", dimension_numbers=dn,
                                 precision=lax.Precision.HIGHEST)
    h = q(jnp.maximum(h + b1.astype(f32)[None, :, None, None], 0.0))
    o = lax.conv_general_dilated(h, w2q, (1, 1), "SAME", dimension_numbers=dn,
                                 precision=lax.Precision.HIGHEST)
    o = jnp.maximum(o + b2.astype(f32)[None, :, None, None], 0.0)
    return o + x_nchw.astype(f32)           # residual uses the original input


if __name__ == "__main__":
    # ResidualBlock(in_planes=8, c_size=8) on 16x16 images; W*C = 128 -> lane-dense
    # slabs, and block_batch=8 -> M = 128 matmul rows per step, grid=(2,).
    N, C, H, W = 16, 8, 16, 16
    key = jax.random.PRNGKey(0)
    kx, kw1, kb1, kw2, kb2 = jax.random.split(key, 5)

    x = jax.random.normal(kx, (N, C, H, W), dtype=jnp.float32)

    # Conv2d(C, C, 3, padding=1) parameters in PyTorch's OIHW layout.
    fan_in = C * 3 * 3
    bound = 1.0 / (fan_in ** 0.5)
    w1 = jax.random.uniform(kw1, (C, C, 3, 3), jnp.float32, -bound, bound)
    b1 = jax.random.uniform(kb1, (C,), jnp.float32, -bound, bound)
    w2 = jax.random.uniform(kw2, (C, C, 3, 3), jnp.float32, -bound, bound)
    b2 = jax.random.uniform(kb2, (C,), jnp.float32, -bound, bound)

    # --- bf16 MXU operands (recommended); f32 accumulate / bias / ReLU / skip add ---
    out_bf16 = jax.block_until_ready(
        residual_block_pallas(x, w1, b1, w2, b2, compute_dtype=jnp.bfloat16))
    ref_bf16 = residual_block_reference(x, w1, b1, w2, b2, emulate_bf16=True)
    assert out_bf16.shape == (N, C, H, W)
    assert jnp.allclose(out_bf16, ref_bf16, atol=2e-2, rtol=2e-2), \
        "bf16 kernel mismatch vs reference"

    # --- full-f32 path: strict numerical cross-check of the same kernel ---
    out_f32 = jax.block_until_ready(
        residual_block_pallas(x, w1, b1, w2, b2, compute_dtype=jnp.float32))
    ref_f32 = residual_block_reference(x, w1, b1, w2, b2, emulate_bf16=False)
    assert jnp.allclose(out_f32, ref_f32, atol=2e-3, rtol=2e-3), \
        "f32 kernel mismatch vs reference"

    print("KERNEL_OK")
</pallas_src>

<mosaic_0001>
module attributes {stable_mosaic.version = 11 : i64} {
  func.func @_residual_block_kernel(%arg0: i32, %arg1: memref<128x128xf32, #tpu.memory_space<vmem>>, %arg2: memref<3x128x128xbf16, #tpu.memory_space<vmem>>, %arg3: memref<1x128xf32, #tpu.memory_space<vmem>>, %arg4: memref<3x128x128xbf16, #tpu.memory_space<vmem>>, %arg5: memref<1x128xf32, #tpu.memory_space<vmem>>, %arg6: memref<128x128xf32, #tpu.memory_space<vmem>>) attributes {dimension_semantics = [#tpu.dimension_semantics<parallel>], iteration_bounds = array<i64: 2>, scalar_prefetch = 0 : i64, scratch_operands = 0 : i64, tpu.core_type = #tpu.core_type<tc>, window_params = [{transform_indices = @transform_0, window_bounds = array<i64: 128, 128>}, {pipeline_mode = #tpu.pipeline_mode<synchronous>, transform_indices = @transform_1, window_bounds = array<i64: 3, 128, 128>}, {pipeline_mode = #tpu.pipeline_mode<synchronous>, transform_indices = @transform_2, window_bounds = array<i64: 1, 128>}, {pipeline_mode = #tpu.pipeline_mode<synchronous>, transform_indices = @transform_3, window_bounds = array<i64: 3, 128, 128>}, {pipeline_mode = #tpu.pipeline_mode<synchronous>, transform_indices = @transform_4, window_bounds = array<i64: 1, 128>}, {transform_indices = @transform_5, window_bounds = array<i64: 128, 128>}]} {
    %c0 = arith.constant 0 : index
    %c0_0 = arith.constant 0 : index
    %0 = vector.load %arg1[%c0, %c0_0] : memref<128x128xf32, #tpu.memory_space<vmem>>, vector<128x128xf32>
    %1 = arith.truncf %0 : vector<128x128xf32> to vector<128x128xbf16>
    %2 = tpu.iota {dimensions = array<i32: 0>} : vector<128x1xi32>
    %c16_i32 = arith.constant 16 : i32
    %3 = vector.broadcast %c16_i32 : i32 to vector<128x1xi32>
    %4 = arith.remsi %2, %3 : vector<128x1xi32>
    %c0_i32 = arith.constant 0 : i32
    %5 = vector.broadcast %c0_i32 : i32 to vector<128x1xi32>
    %6 = arith.cmpi sgt, %4, %5 : vector<128x1xi32>
    %c15_i32 = arith.constant 15 : i32
    %7 = vector.broadcast %c15_i32 : i32 to vector<128x1xi32>
    %8 = arith.cmpi slt, %4, %7 : vector<128x1xi32>
    %cst = arith.constant 0.000000e+00 : bf16
    %9 = vector.broadcast %cst : bf16 to vector<1x128xbf16>
    %10 = vector.extract_strided_slice %1 {offsets = [0, 0], sizes = [127, 128], strides = [1, 1]} : vector<128x128xbf16> to vector<127x128xbf16>
    %11 = tpu.concatenate %9, %10 in 0 : vector<1x128xbf16>, vector<127x128xbf16> -> vector<128x128xbf16>
    %cst_1 = arith.constant 0.000000e+00 : bf16
    %12 = vector.broadcast %cst_1 : bf16 to vector<128x128xbf16>
    %13 = vector.shape_cast %6 : vector<128x1xi1> to vector<128x1xi1>
    %14 = vector.broadcast %13 : vector<128x1xi1> to vector<128x128xi1>
    %15 = arith.select %14, %11, %12 : vector<128x128xi1>, vector<128x128xbf16>
    %16 = vector.extract_strided_slice %1 {offsets = [1, 0], sizes = [127, 128], strides = [1, 1]} : vector<128x128xbf16> to vector<127x128xbf16>
    %17 = tpu.concatenate %16, %9 in 0 : vector<127x128xbf16>, vector<1x128xbf16> -> vector<128x128xbf16>
    %cst_2 = arith.constant 0.000000e+00 : bf16
    %18 = vector.broadcast %cst_2 : bf16 to vector<128x128xbf16>
    %19 = vector.shape_cast %8 : vector<128x1xi1> to vector<128x1xi1>
    %20 = vector.broadcast %19 : vector<128x1xi1> to vector<128x128xi1>
    %21 = arith.select %20, %17, %18 : vector<128x128xi1>, vector<128x128xbf16>
    %c0_3 = arith.constant 0 : index
    %c0_4 = arith.constant 0 : index
    %c0_5 = arith.constant 0 : index
    %22 = vector.load %arg2[%c0_3, %c0_4, %c0_5] : memref<3x128x128xbf16, #tpu.memory_space<vmem>>, vector<1x128x128xbf16>
    %23 = vector.shape_cast %22 : vector<1x128x128xbf16> to vector<128x128xbf16>
    %cst_6 = arith.constant dense<0.000000e+00> : vector<128x128xf32>
    %24 = tpu.matmul %15, %23, %cst_6 {dimension_numbers = #tpu.dot_dimension_numbers<[1], [0], [0], [1], [0, 0, 1, 1], [], []>} : vector<128x128xbf16>, vector<128x128xbf16>, vector<128x128xf32> -> vector<128x128xf32>
    %c1 = arith.constant 1 : index
    %c0_7 = arith.constant 0 : index
    %c0_8 = arith.constant 0 : index
    %25 = vector.load %arg2[%c1, %c0_7, %c0_8] : memref<3x128x128xbf16, #tpu.memory_space<vmem>>, vector<1x128x128xbf16>
    %26 = vector.shape_cast %25 : vector<1x128x128xbf16> to vector<128x128xbf16>
    %cst_9 = arith.constant dense<0.000000e+00> : vector<128x128xf32>
    %27 = tpu.matmul %1, %26, %cst_9 {dimension_numbers = #tpu.dot_dimension_numbers<[1], [0], [0], [1], [0, 0, 1, 1], [], []>} : vector<128x128xbf16>, vector<128x128xbf16>, vector<128x128xf32> -> vector<128x128xf32>
    %28 = arith.addf %24, %27 : vector<128x128xf32>
    %c2 = arith.constant 2 : index
    %c0_10 = arith.constant 0 : index
    %c0_11 = arith.constant 0 : index
    %29 = vector.load %arg2[%c2, %c0_10, %c0_11] : memref<3x128x128xbf16, #tpu.memory_space<vmem>>, vector<1x128x128xbf16>
    %30 = vector.shape_cast %29 : vector<1x128x128xbf16> to vector<128x128xbf16>
    %cst_12 = arith.constant dense<0.000000e+00> : vector<128x128xf32>
    %31 = tpu.matmul %21, %30, %cst_12 {dimension_numbers = #tpu.dot_dimension_numbers<[1], [0], [0], [1], [0, 0, 1, 1], [], []>} : vector<128x128xbf16>, vector<128x128xbf16>, vector<128x128xf32> -> vector<128x128xf32>
    %32 = arith.addf %28, %31 : vector<128x128xf32>
    %c0_13 = arith.constant 0 : index
    %c0_14 = arith.constant 0 : index
    %33 = vector.load %arg3[%c0_13, %c0_14] : memref<1x128xf32, #tpu.memory_space<vmem>>, vector<1x128xf32>
    %34 = vector.broadcast %33 : vector<1x128xf32> to vector<128x128xf32>
    %35 = arith.addf %32, %34 : vector<128x128xf32>
    %cst_15 = arith.constant 0.000000e+00 : f32
    %36 = vector.broadcast %cst_15 : f32 to vector<128x128xf32>
    %37 = arith.maximumf %35, %36 : vector<128x128xf32>
    %38 = arith.truncf %37 : vector<128x128xf32> to vector<128x128xbf16>
    %cst_16 = arith.constant 0.000000e+00 : bf16
    %39 = vector.broadcast %cst_16 : bf16 to vector<1x128xbf16>
    %40 = vector.extract_strided_slice %38 {offsets = [0, 0], sizes = [127, 128], strides = [1, 1]} : vector<128x128xbf16> to vector<127x128xbf16>
    %41 = tpu.concatenate %39, %40 in 0 : vector<1x128xbf16>, vector<127x128xbf16> -> vector<128x128xbf16>
    %cst_17 = arith.constant 0.000000e+00 : bf16
    %42 = vector.broadcast %cst_17 : bf16 to vector<128x128xbf16>
    %43 = vector.shape_cast %6 : vector<128x1xi1> to vector<128x1xi1>
    %44 = vector.broadcast %43 : vector<128x1xi1> to vector<128x128xi1>
    %45 = arith.select %44, %41, %42 : vector<128x128xi1>, vector<128x128xbf16>
    %46 = vector.extract_strided_slice %38 {offsets = [1, 0], sizes = [127, 128], strides = [1, 1]} : vector<128x128xbf16> to vector<127x128xbf16>
    %47 = tpu.concatenate %46, %39 in 0 : vector<127x128xbf16>, vector<1x128xbf16> -> vector<128x128xbf16>
    %cst_18 = arith.constant 0.000000e+00 : bf16
    %48 = vector.broadcast %cst_18 : bf16 to vector<128x128xbf16>
    %49 = vector.shape_cast %8 : vector<128x1xi1> to vector<128x1xi1>
    %50 = vector.broadcast %49 : vector<128x1xi1> to vector<128x128xi1>
    %51 = arith.select %50, %47, %48 : vector<128x128xi1>, vector<128x128xbf16>
    %c0_19 = arith.constant 0 : index
    %c0_20 = arith.constant 0 : index
    %c0_21 = arith.constant 0 : index
    %52 = vector.load %arg4[%c0_19, %c0_20, %c0_21] : memref<3x128x128xbf16, #tpu.memory_space<vmem>>, vector<1x128x128xbf16>
    %53 = vector.shape_cast %52 : vector<1x128x128xbf16> to vector<128x128xbf16>
    %cst_22 = arith.constant dense<0.000000e+00> : vector<128x128xf32>
    %54 = tpu.matmul %45, %53, %cst_22 {dimension_numbers = #tpu.dot_dimension_numbers<[1], [0], [0], [1], [0, 0, 1, 1], [], []>} : vector<128x128xbf16>, vector<128x128xbf16>, vector<128x128xf32> -> vector<128x128xf32>
    %c1_23 = arith.constant 1 : index
    %c0_24 = arith.constant 0 : index
    %c0_25 = arith.constant 0 : index
    %55 = vector.load %arg4[%c1_23, %c0_24, %c0_25] : memref<3x128x128xbf16, #tpu.memory_space<vmem>>, vector<1x128x128xbf16>
    %56 = vector.shape_cast %55 : vector<1x128x128xbf16> to vector<128x128xbf16>
    %cst_26 = arith.constant dense<0.000000e+00> : vector<128x128xf32>
    %57 = tpu.matmul %38, %56, %cst_26 {dimension_numbers = #tpu.dot_dimension_numbers<[1], [0], [0], [1], [0, 0, 1, 1], [], []>} : vector<128x128xbf16>, vector<128x128xbf16>, vector<128x128xf32> -> vector<128x128xf32>
    %58 = arith.addf %54, %57 : vector<128x128xf32>
    %c2_27 = arith.constant 2 : index
    %c0_28 = arith.constant 0 : index
    %c0_29 = arith.constant 0 : index
    %59 = vector.load %arg4[%c2_27, %c0_28, %c0_29] : memref<3x128x128xbf16, #tpu.memory_space<vmem>>, vector<1x128x128xbf16>
    %60 = vector.shape_cast %59 : vector<1x128x128xbf16> to vector<128x128xbf16>
    %cst_30 = arith.constant dense<0.000000e+00> : vector<128x128xf32>
    %61 = tpu.matmul %51, %60, %cst_30 {dimension_numbers = #tpu.dot_dimension_numbers<[1], [0], [0], [1], [0, 0, 1, 1], [], []>} : vector<128x128xbf16>, vector<128x128xbf16>, vector<128x128xf32> -> vector<128x128xf32>
    %62 = arith.addf %58, %61 : vector<128x128xf32>
    %c0_31 = arith.constant 0 : index
    %c0_32 = arith.constant 0 : index
    %63 = vector.load %arg5[%c0_31, %c0_32] : memref<1x128xf32, #tpu.memory_space<vmem>>, vector<1x128xf32>
    %64 = vector.broadcast %63 : vector<1x128xf32> to vector<128x128xf32>
    %65 = arith.addf %62, %64 : vector<128x128xf32>
    %cst_33 = arith.constant 0.000000e+00 : f32
    %66 = vector.broadcast %cst_33 : f32 to vector<128x128xf32>
    %67 = arith.maximumf %65, %66 : vector<128x128xf32>
    %68 = arith.addf %67, %0 : vector<128x128xf32>
    %c0_34 = arith.constant 0 : index
    %c0_35 = arith.constant 0 : index
    %69 = vector.load %arg6[%c0_34, %c0_35] : memref<128x128xf32, #tpu.memory_space<vmem>>, vector<128x128xf32>
    tpu.vector_store %arg6[%c0_34, %c0_35], %68 {strides = array<i32>} : memref<128x128xf32, #tpu.memory_space<vmem>>, vector<128x128xf32>,
    return
  }
  func.func @transform_0(%arg0: i32) -> (i32, i32) {
    %c0_i32 = arith.constant 0 : i32
    %c0_i32_0 = arith.constant 0 : i32
    return %arg0, %c0_i32 : i32, i32
  }
  func.func @transform_1(%arg0: i32) -> (i32, i32, i32) {
    %c0_i32 = arith.constant 0 : i32
    %c0_i32_0 = arith.constant 0 : i32
    %c0_i32_1 = arith.constant 0 : i32
    %c0_i32_2 = arith.constant 0 : i32
    return %c0_i32, %c0_i32_0, %c0_i32_1 : i32, i32, i32
  }
  func.func @transform_2(%arg0: i32) -> (i32, i32) {
    %c0_i32 = arith.constant 0 : i32
    %c0_i32_0 = arith.constant 0 : i32
    %c0_i32_1 = arith.constant 0 : i32
    return %c0_i32, %c0_i32_0 : i32, i32
  }
  func.func @transform_3(%arg0: i32) -> (i32, i32, i32) {
    %c0_i32 = arith.constant 0 : i32
    %c0_i32_0 = arith.constant 0 : i32
    %c0_i32_1 = arith.constant 0 : i32
    %c0_i32_2 = arith.constant 0 : i32
    return %c0_i32, %c0_i32_0, %c0_i32_1 : i32, i32, i32
  }
  func.func @transform_4(%arg0: i32) -> (i32, i32) {
    %c0_i32 = arith.constant 0 : i32
    %c0_i32_0 = arith.constant 0 : i32
    %c0_i32_1 = arith.constant 0 : i32
    return %c0_i32, %c0_i32_0 : i32, i32
  }
  func.func @transform_5(%arg0: i32) -> (i32, i32) {
    %c0_i32 = arith.constant 0 : i32
    %c0_i32_0 = arith.constant 0 : i32
    return %arg0, %c0_i32 : i32, i32
  }
}

</mosaic_0001>

<llo_original>
// kernel: tpu_custom_call.1
$region0: #{tpu_custom_call.1}
  #allocation0 [shape = 'u32[]', space=smem, size = 0x4, offset = 0x4, fixed_abs, tag = 'smem constant byte address 0x4 - core index']
  #allocation1 [shape = 'u32[144,128]{1,0:T(1,128)}', space=vmem, size = 0x12000, scoped, tag = 'internal scratch']
  %s0 = inlined_call_operand.hbm [shape: f32[256,128], index: 0, kind: input, shape index: {}]
  %s1 = inlined_call_operand.hbm [shape: bf16[3,128,128], index: 1, kind: input, shape index: {}]
  %s2 = inlined_call_operand.vmem [shape: f32[1,128], index: 2, kind: input, shape index: {}]
  %s3 = inlined_call_operand.hbm [shape: bf16[3,128,128], index: 3, kind: input, shape index: {}]
  %s4 = inlined_call_operand.vmem [shape: f32[1,128], index: 4, kind: input, shape index: {}]
  %s5 = inlined_call_operand.hbm [shape: f32[256,128], index: 5, kind: output, shape index: {}]
  %s6 = sld [smem:[#allocation0]]
  $region65: #{tpu_custom_call.1} parent=0
    _
  %s8 = ssub.s32 1, %s6
  %s9 = scalar_select 0, %s8, %s6
  $region1: #{tpu_custom_call.1} parent=0
    #allocation2 [shape = 'u8[131072]{0}', space=vmem, size = 0x20000, scoped, tag = 'input window, operand 0']
    #allocation3 [shape = 's32[2]{0}', space=sflag, size = 0x8, scoped, tag = 'scoped memory for tpu_custom_call.1']
    #allocation4 [shape = 's32[2]{0}', space=sflag, size = 0x8, scoped, tag = 'scoped memory for tpu_custom_call.1']
    #allocation5 [shape = 'u8[98304]{0}', space=vmem, size = 0x18000, scoped, tag = 'input window, operand 1, single buffered']
    #allocation6 [shape = 's32[1]{0}', space=sflag, size = 0x4, scoped, tag = 'scoped memory for tpu_custom_call.1']
    #allocation7 [shape = 'u8[98304]{0}', space=vmem, size = 0x18000, scoped, tag = 'input window, operand 3, single buffered']
    #allocation8 [shape = 'u8[131072]{0}', space=vmem, size = 0x20000, scoped, tag = 'output window, operand 0']
    %10 = vsyncpa [#allocation3], 0
    %s11 = scalar_lea.sflag [#allocation3], 1
    %12 = vsyncpa %s11, 0
    %13 = vsyncpa [#allocation6], 0
    %14 = vsyncpa [#allocation4], 0
    %s15 = scalar_lea.sflag [#allocation4], 1
    %16 = vsyncpa %s15, 0
    loop: start=0, step=1, limit=4
    $region2: #{tpu_custom_call.1} parent=1 // loop_pre_header
      _
    $region3: #{tpu_custom_call.1} parent=1 // loop_header
      %s18 = sphi 0, %s22
      %p19 = scmp.ge.s32.totalorder %s18, 4
      %s28 = sphi 0, %s30
      %s31 = sphi 0, %s28
      %s32 = sphi 0, %s31
      %s48 = sphi 0, %s32
      %s52 = sphi 0, %s52
      %s54 = sphi 0, %s52
      %s55 = sphi 0, %s54
      %s69 = sphi 0, %s55
      %s73 = sphi 0, %s73
      %s75 = sphi 0, %s73
      %s76 = sphi 0, %s75
      %s90 = sphi 0, %s76
      %s94 = sphi 0, %s94
      %s96 = sphi 0, %s94
      %s97 = sphi 0, %s96
      %s111 = sphi 0, %s97
      %s115 = sphi 0, %s115
      %s117 = sphi 0, %s115
      %s118 = sphi 0, %s117
      %s132 = sphi 0, %s118
      %s138 = sphi 0, %s140
      %s141 = sphi 0, %s138
      %s142 = sphi 0, %s141
      %s158 = sphi 0, %s142
    $region4: #{tpu_custom_call.1} parent=1 // loop_header_branch
      %21 = sbr.rel (%p19) target = $region8
    $region5: #{tpu_custom_call.1} parent=1 // loop_body
      %s23 = ssub.s32 %s18, 1
      %s24 = ssub.s32 %s18, 2
      %s25 = sadd.s32 %s18, 1
      %s26 = ssub.s32 %s18, %s25
      %p27 = scmp.eq.s32.totalorder %s26, 0
      %s29 = sadd.s32 %s28, 1
      %s30 = scalar_select %p27, %s28, %s29
      %p33 = pneg %p27
      %p34 = scmp.eq.s32.totalorder %s18, 1
      %p35 = por %p33, %p34
      %p36 = scmp.ne.s32.totalorder %s28, %s31
      %p37 = scmp.eq.s32.totalorder %s18, 0
      %p38 = por %p36, %p37
      %p39 = scmp.ne.s32.totalorder %s28, %s31
      %p40 = scmp.eq.s32.totalorder %s23, 1
      %p41 = por %p39, %p40
      %p42 = scmp.ne.s32.totalorder %s31, %s32
      %p43 = scmp.eq.s32.totalorder %s23, 0
      %p44 = por %p42, %p43
      %p45 = scmp.ne.s32.totalorder %s31, %s32
      %p46 = scmp.eq.s32.totalorder %s24, 1
      %p47 = por %p45, %p46
      %p49 = scmp.ne.s32.totalorder %s32, %s48
      %p50 = scmp.eq.s32.totalorder %s24, 0
      %p51 = por %p49, %p50
      %s53 = sadd.s32 %s52, 1
      %p56 = scmp.eq.s32.totalorder %s18, 1
      %p57 = scmp.ne.s32.totalorder %s52, %s54
      %p58 = scmp.eq.s32.totalorder %s18, 0
      %p59 = por %p57, %p58
      %p60 = scmp.ne.s32.totalorder %s52, %s54
      %p61 = scmp.eq.s32.totalorder %s23, 1
      %p62 = por %p60, %p61
      %p63 = scmp.ne.s32.totalorder %s54, %s55
      %p64 = scmp.eq.s32.totalorder %s23, 0
      %p65 = por %p63, %p64
      %p66 = scmp.ne.s32.totalorder %s54, %s55
      %p67 = scmp.eq.s32.totalorder %s24, 1
      %p68 = por %p66, %p67
      %p70 = scmp.ne.s32.totalorder %s55, %s69
      %p71 = scmp.eq.s32.totalorder %s24, 0
      %p72 = por %p70, %p71
      %s74 = sadd.s32 %s73, 1
      %p77 = scmp.eq.s32.totalorder %s18, 1
      %p78 = scmp.ne.s32.totalorder %s73, %s75
      %p79 = scmp.eq.s32.totalorder %s18, 0
      %p80 = por %p78, %p79
      %p81 = scmp.ne.s32.totalorder %s73, %s75
      %p82 = scmp.eq.s32.totalorder %s23, 1
      %p83 = por %p81, %p82
      %p84 = scmp.ne.s32.totalorder %s75, %s76
      %p85 = scmp.eq.s32.totalorder %s23, 0
      %p86 = por %p84, %p85
      %p87 = scmp.ne.s32.totalorder %s75, %s76
      %p88 = scmp.eq.s32.totalorder %s24, 1
      %p89 = por %p87, %p88
      %p91 = scmp.ne.s32.totalorder %s76, %s90
      %p92 = scmp.eq.s32.totalorder %s24, 0
      %p93 = por %p91, %p92
      %s95 = sadd.s32 %s94, 1
      %p98 = scmp.eq.s32.totalorder %s18, 1
      %p99 = scmp.ne.s32.totalorder %s94, %s96
      %p100 = scmp.eq.s32.totalorder %s18, 0
      %p101 = por %p99, %p100
      %p102 = scmp.ne.s32.totalorder %s94, %s96
      %p103 = scmp.eq.s32.totalorder %s23, 1
      %p104 = por %p102, %p103
      %p105 = scmp.ne.s32.totalorder %s96, %s97
      %p106 = scmp.eq.s32.totalorder %s23, 0
      %p107 = por %p105, %p106
      %p108 = scmp.ne.s32.totalorder %s96, %s97
      %p109 = scmp.eq.s32.totalorder %s24, 1
      %p110 = por %p108, %p109
      %p112 = scmp.ne.s32.totalorder %s97, %s111
      %p113 = scmp.eq.s32.totalorder %s24, 0
      %p114 = por %p112, %p113
      %s116 = sadd.s32 %s115, 1
      %p119 = scmp.eq.s32.totalorder %s18, 1
      %p120 = scmp.ne.s32.totalorder %s115, %s117
      %p121 = scmp.eq.s32.totalorder %s18, 0
      %p122 = por %p120, %p121
      %p123 = scmp.ne.s32.totalorder %s115, %s117
      %p124 = scmp.eq.s32.totalorder %s23, 1
      %p125 = por %p123, %p124
      %p126 = scmp.ne.s32.totalorder %s117, %s118
      %p127 = scmp.eq.s32.totalorder %s23, 0
      %p128 = por %p126, %p127
      %p129 = scmp.ne.s32.totalorder %s117, %s118
      %p130 = scmp.eq.s32.totalorder %s24, 1
      %p131 = por %p129, %p130
      %p133 = scmp.ne.s32.totalorder %s118, %s132
      %p134 = scmp.eq.s32.totalorder %s24, 0
      %p135 = por %p133, %p134
      %s136 = ssub.s32 %s18, %s25
      %p137 = scmp.eq.s32.totalorder %s136, 0
      %s139 = sadd.s32 %s138, 1
      %s140 = scalar_select %p137, %s138, %s139
      %p143 = pneg %p137
      %p144 = scmp.eq.s32.totalorder %s18, 1
      %p145 = por %p143, %p144
      %p146 = scmp.ne.s32.totalorder %s138, %s141
      %p147 = scmp.eq.s32.totalorder %s18, 0
      %p148 = por %p146, %p147
      %p149 = scmp.ne.s32.totalorder %s138, %s141
      %p150 = scmp.eq.s32.totalorder %s23, 1
      %p151 = por %p149, %p150
      %p152 = scmp.ne.s32.totalorder %s141, %s142
      %p153 = scmp.eq.s32.totalorder %s23, 0
      %p154 = por %p152, %p153
      %p155 = scmp.ne.s32.totalorder %s141, %s142
      %p156 = scmp.eq.s32.totalorder %s24, 1
      %p157 = por %p155, %p156
      %p159 = scmp.ne.s32.totalorder %s142, %s158
      %p160 = scmp.eq.s32.totalorder %s24, 0
      %p161 = por %p159, %p160
      %p162 = scmp.le.s32.totalorder 1, %s18
      %p163 = scmp.lt.s32.totalorder %s18, 3
      %p164 = pnand %p162, %p163
      %p165 = pneg %p164
      // Predicated region
      $region9: #{tpu_custom_call.1} parent=5 // pred_check
        _
      $region10: #{tpu_custom_call.1} parent=5 // pred_check_branch
        %167 = sbr.rel (%p164) target = $region12
      $region11: #{tpu_custom_call.1} parent=5 // pred_region
        %s168 = ssub.s32 %s18, 1
        // Predicated region
        $region13: #{tpu_custom_call.1} parent=11 // pred_check
          %p169 = pneg %p65
        $region14: #{tpu_custom_call.1} parent=11 // pred_check_branch
          %171 = sbr.rel (%p169) target = $region16
        $region15: #{tpu_custom_call.1} parent=11 // pred_region
          %s173 = ssub.s32 3072, 3072
          %174 = vsyncadd [#allocation6], %s173
          %s175 = sshll.u32 [#allocation5], 4
          %s176 = int_to_ptr.vmem [resolvable:$true] %s175
          %181 = dma.hbm_to_vmem [thread:$0]  %s1, 3072, %s176, [#allocation6], 64, 64, 4
        $region16: #{tpu_custom_call.1} parent=11 // pred_fallthru
          _
        // Predicated region
        $region17: #{tpu_custom_call.1} parent=11 // pred_check
          %p182 = pneg %p86
        $region18: #{tpu_custom_call.1} parent=11 // pred_check_branch
          %184 = sbr.rel (%p182) target = $region20
        $region19: #{tpu_custom_call.1} parent=11 // pred_region
          _
        $region20: #{tpu_custom_call.1} parent=11 // pred_fallthru
          _
        // Predicated region
        $region21: #{tpu_custom_call.1} parent=11 // pred_check
          %p185 = pneg %p107
        $region22: #{tpu_custom_call.1} parent=11 // pred_check_branch
          %187 = sbr.rel (%p185) target = $region24
        $region23: #{tpu_custom_call.1} parent=11 // pred_region
          %s189 = ssub.s32 3072, 3072
          %190 = vsyncadd [#allocation6], %s189
          %s191 = sshll.u32 [#allocation7], 4
          %s192 = int_to_ptr.vmem [resolvable:$true] %s191
          %197 = dma.hbm_to_vmem [thread:$0]  %s3, 3072, %s192, [#allocation6], 64, 64, 4
        $region24: #{tpu_custom_call.1} parent=11 // pred_fallthru
          _
        // Predicated region
        $region25: #{tpu_custom_call.1} parent=11 // pred_check
          %p198 = pneg %p128
        $region26: #{tpu_custom_call.1} parent=11 // pred_check_branch
          %200 = sbr.rel (%p198) target = $region28
        $region27: #{tpu_custom_call.1} parent=11 // pred_region
          _
        $region28: #{tpu_custom_call.1} parent=11 // pred_fallthru
          _
      $region12: #{tpu_custom_call.1} parent=5 // pred_fallthru
        _
      %p201 = scmp.lt.s32.totalorder %s18, 2
      // Predicated region
      $region29: #{tpu_custom_call.1} parent=5 // pred_check
        %p202 = pneg %p201
      $region30: #{tpu_custom_call.1} parent=5 // pred_check_branch
        %204 = sbr.rel (%p202) target = $region32
      $region31: #{tpu_custom_call.1} parent=5 // pred_region
        // Predicated region
        $region33: #{tpu_custom_call.1} parent=31 // pred_check
          %p205 = pneg %p38
        $region34: #{tpu_custom_call.1} parent=31 // pred_check_branch
          %207 = sbr.rel (%p205) target = $region36
        $region35: #{tpu_custom_call.1} parent=31 // pred_region
          %s208 = sand.u32 %s28, 1
          %s209 = scalar_lea.sflag [#allocation3], %s208
          %s210 = sand.u32 %s28, 1
          %s211 = smul.addr %s210, 128
          %s212 = scalar_lea.vmem [#allocation2], %s211
          %s213 = smul.u32 16, %s18
          %s215 = ssub.s32 2048, 2048
          %216 = vsyncadd %s209, %s215
          %s217 = smul.addr %s213, 128
          %s218 = scalar_lea.hbm %s0, %s217
          %s219 = sshll.u32 %s212, 4
          %s220 = int_to_ptr.vmem [resolvable:$true] %s219
          %225 = dma.hbm_to_vmem [thread:$0]  %s218, 2048, %s220, %s209, 128, 128, 8
        $region36: #{tpu_custom_call.1} parent=31 // pred_fallthru
          _
      $region32: #{tpu_custom_call.1} parent=5 // pred_fallthru
        _
      %p226 = scmp.le.s32.totalorder 1, %s18
      %p227 = scmp.lt.s32.totalorder %s18, 3
      %p228 = pnand %p226, %p227
      %p229 = pneg %p228
      // Predicated region
      $region37: #{tpu_custom_call.1} parent=5 // pred_check
        _
      $region38: #{tpu_custom_call.1} parent=5 // pred_check_branch
        %231 = sbr.rel (%p228) target = $region40
      $region39: #{tpu_custom_call.1} parent=5 // pred_region
        %s232 = ssub.s32 %s18, 1
        %s233 = sand.u32 %s31, 1
        %s234 = scalar_lea.sflag [#allocation3], %s233
        %s235 = sand.u32 %s31, 1
        %s236 = smul.addr %s235, 128
        %s237 = scalar_lea.vmem [#allocation2], %s236
        // Predicated region
        $region41: #{tpu_custom_call.1} parent=39 // pred_check
          %p238 = pneg %p44
        $region42: #{tpu_custom_call.1} parent=39 // pred_check_branch
          %240 = sbr.rel (%p238) target = $region44
        $region43: #{tpu_custom_call.1} parent=39 // pred_region
          %241 = dma.done %s234, 2048
        $region44: #{tpu_custom_call.1} parent=39 // pred_fallthru
          _
        // Predicated region
        $region45: #{tpu_custom_call.1} parent=39 // pred_check
          %p242 = pneg %p65
        $region46: #{tpu_custom_call.1} parent=39 // pred_check_branch
          %244 = sbr.rel (%p242) target = $region48
        $region47: #{tpu_custom_call.1} parent=39 // pred_region
          %245 = dma.done [#allocation6], 3072
        $region48: #{tpu_custom_call.1} parent=39 // pred_fallthru
          _
        // Predicated region
        $region49: #{tpu_custom_call.1} parent=39 // pred_check
          %p246 = pneg %p107
        $region50: #{tpu_custom_call.1} parent=39 // pred_check_branch
          %248 = sbr.rel (%p246) target = $region52
        $region51: #{tpu_custom_call.1} parent=39 // pred_region
          %249 = dma.done [#allocation6], 3072
        $region52: #{tpu_custom_call.1} parent=39 // pred_fallthru
          _
        %s250 = sand.u32 %s31, 1
        %s251 = scalar_lea.sflag [#allocation3], %s250
        %s252 = sand.u32 %s31, 1
        %s253 = smul.addr %s252, 128
        %s254 = scalar_lea.vmem [#allocation2], %s253
        %p255 = pneg %p44
        %p256 = pneg %p41
        %p257 = pneg %p65
        %p258 = pneg %p62
        %p259 = pneg %p86
        %p260 = pneg %p83
        %p261 = pneg %p107
        %p262 = pneg %p104
        %p263 = pneg %p128
        %p264 = pneg %p125
        %p265 = pneg %p154
        %p266 = pneg %p151
        %s267 = sand.u32 %s141, 1
        %s268 = scalar_lea.sflag [#allocation4], %s267
        %s269 = sand.u32 %s141, 1
        %s270 = smul.addr %s269, 128
        %s271 = scalar_lea.vmem [#allocation8], %s270
        %s272 = smul.u32 16, %s23
        %s273 = smul.u32 16, %s23
        %v277 = vld [vmem:[%s237] sm:$0xff]
        %v278 = vld [vmem:[%s237 + $0x8] sm:$0xff]
        %v279 = vld [vmem:[%s237 + $0x10] sm:$0xff]
        %v280 = vld [vmem:[%s237 + $0x18] sm:$0xff]
        %v281 = vld [vmem:[%s237 + $0x20] sm:$0xff]
        %v282 = vld [vmem:[%s237 + $0x28] sm:$0xff]
        %v283 = vld [vmem:[%s237 + $0x30] sm:$0xff]
        %v284 = vld [vmem:[%s237 + $0x38] sm:$0xff]
        %v285 = vld [vmem:[%s237 + $0x40] sm:$0xff]
        %v286 = vld [vmem:[%s237 + $0x48] sm:$0xff]
        %v287 = vld [vmem:[%s237 + $0x50] sm:$0xff]
        %v288 = vld [vmem:[%s237 + $0x58] sm:$0xff]
        %v289 = vld [vmem:[%s237 + $0x60] sm:$0xff]
        %v290 = vld [vmem:[%s237 + $0x68] sm:$0xff]
        %v291 = vld [vmem:[%s237 + $0x70] sm:$0xff]
        %v292 = vld [vmem:[%s237 + $0x78] sm:$0xff]
        %v293 = vpack.c.bf16 %v278, %v277
        %v294 = vpack.c.bf16 %v280, %v279
        %v295 = vpack.c.bf16 %v282, %v281
        %v296 = vpack.c.bf16 %v284, %v283
        %v297 = vpack.c.bf16 %v286, %v285
        %v298 = vpack.c.bf16 %v288, %v287
        %v299 = vpack.c.bf16 %v290, %v289
        %v300 = vpack.c.bf16 %v292, %v291
        %v301 = vlaneseq
        %v302 = vshrl.u32 %v301, 7
        %v303 = vadd.s32 %v302, 8
        %v304 = vadd.s32 %v302, 16
        %v305 = vadd.s32 %v302, 24
        %v306 = vadd.s32 %v302, 32
        %v307 = vadd.s32 %v302, 40
        %v308 = vadd.s32 %v302, 48
        %v309 = vadd.s32 %v302, 56
        %v310 = vadd.s32 %v302, 64
        %v311 = vadd.s32 %v302, 72
        %v312 = vadd.s32 %v302, 80
        %v313 = vadd.s32 %v302, 88
        %v314 = vadd.s32 %v302, 96
        %v315 = vadd.s32 %v302, 104
        %v316 = vadd.s32 %v302, 112
        %v317 = vadd.s32 %v302, 120
        %vm318 = vcmp.lt.s32.totalorder %v302, 0
        %v319 = vsub.s32 0, %v302
        %v320 = vsel %vm318, %v319, %v302
        %v321 = vshrl.u32 %v320, 4
        %v322 = vand.u32 %v320, 15
        %v323 = vsub.s32 0, %v322
        %v324 = vsel %vm318, %v323, %v322
        %vm325 = vcmp.lt.s32.totalorder %v303, 0
        %v326 = vsub.s32 0, %v303
        %v327 = vsel %vm325, %v326, %v303
        %v328 = vshrl.u32 %v327, 4
        %v329 = vand.u32 %v327, 15
        %v330 = vsub.s32 0, %v329
        %v331 = vsel %vm325, %v330, %v329
        %vm332 = vcmp.lt.s32.totalorder %v304, 0
        %v333 = vsub.s32 0, %v304
        %v334 = vsel %vm332, %v333, %v304
        %v335 = vshrl.u32 %v334, 4
        %v336 = vand.u32 %v334, 15
        %v337 = vsub.s32 0, %v336
        %v338 = vsel %vm332, %v337, %v336
        %vm339 = vcmp.lt.s32.totalorder %v305, 0
        %v340 = vsub.s32 0, %v305
        %v341 = vsel %vm339, %v340, %v305
        %v342 = vshrl.u32 %v341, 4
        %v343 = vand.u32 %v341, 15
        %v344 = vsub.s32 0, %v343
        %v345 = vsel %vm339, %v344, %v343
        %vm346 = vcmp.lt.s32.totalorder %v306, 0
        %v347 = vsub.s32 0, %v306
        %v348 = vsel %vm346, %v347, %v306
        %v349 = vshrl.u32 %v348, 4
        %v350 = vand.u32 %v348, 15
        %v351 = vsub.s32 0, %v350
        %v352 = vsel %vm346, %v351, %v350
        %vm353 = vcmp.lt.s32.totalorder %v307, 0
        %v354 = vsub.s32 0, %v307
        %v355 = vsel %vm353, %v354, %v307
        %v356 = vshrl.u32 %v355, 4
        %v357 = vand.u32 %v355, 15
        %v358 = vsub.s32 0, %v357
        %v359 = vsel %vm353, %v358, %v357
        %vm360 = vcmp.lt.s32.totalorder %v308, 0
        %v361 = vsub.s32 0, %v308
        %v362 = vsel %vm360, %v361, %v308
        %v363 = vshrl.u32 %v362, 4
        %v364 = vand.u32 %v362, 15
        %v365 = vsub.s32 0, %v364
        %v366 = vsel %vm360, %v365, %v364
        %vm367 = vcmp.lt.s32.totalorder %v309, 0
        %v368 = vsub.s32 0, %v309
        %v369 = vsel %vm367, %v368, %v309
        %v370 = vshrl.u32 %v369, 4
        %v371 = vand.u32 %v369, 15
        %v372 = vsub.s32 0, %v371
        %v373 = vsel %vm367, %v372, %v371
        %vm374 = vcmp.lt.s32.totalorder %v310, 0
        %v375 = vsub.s32 0, %v310
        %v376 = vsel %vm374, %v375, %v310
        %v377 = vshrl.u32 %v376, 4
        %v378 = vand.u32 %v376, 15
        %v379 = vsub.s32 0, %v378
        %v380 = vsel %vm374, %v379, %v378
        %vm381 = vcmp.lt.s32.totalorder %v311, 0
        %v382 = vsub.s32 0, %v311
        %v383 = vsel %vm381, %v382, %v311
        %v384 = vshrl.u32 %v383, 4
        %v385 = vand.u32 %v383, 15
        %v386 = vsub.s32 0, %v385
        %v387 = vsel %vm381, %v386, %v385
        %vm388 = vcmp.lt.s32.totalorder %v312, 0
        %v389 = vsub.s32 0, %v312
        %v390 = vsel %vm388, %v389, %v312
        %v391 = vshrl.u32 %v390, 4
        %v392 = vand.u32 %v390, 15
        %v393 = vsub.s32 0, %v392
        %v394 = vsel %vm388, %v393, %v392
        %vm395 = vcmp.lt.s32.totalorder %v313, 0
        %v396 = vsub.s32 0, %v313
        %v397 = vsel %vm395, %v396, %v313
        %v398 = vshrl.u32 %v397, 4
        %v399 = vand.u32 %v397, 15
        %v400 = vsub.s32 0, %v399
        %v401 = vsel %vm395, %v400, %v399
        %vm402 = vcmp.lt.s32.totalorder %v314, 0
        %v403 = vsub.s32 0, %v314
        %v404 = vsel %vm402, %v403, %v314
        %v405 = vshrl.u32 %v404, 4
        %v406 = vand.u32 %v404, 15
        %v407 = vsub.s32 0, %v406
        %v408 = vsel %vm402, %v407, %v406
        %vm409 = vcmp.lt.s32.totalorder %v315, 0
        %v410 = vsub.s32 0, %v315
        %v411 = vsel %vm409, %v410, %v315
        %v412 = vshrl.u32 %v411, 4
        %v413 = vand.u32 %v411, 15
        %v414 = vsub.s32 0, %v413
        %v415 = vsel %vm409, %v414, %v413
        %vm416 = vcmp.lt.s32.totalorder %v316, 0
        %v417 = vsub.s32 0, %v316
        %v418 = vsel %vm416, %v417, %v316
        %v419 = vshrl.u32 %v418, 4
        %v420 = vand.u32 %v418, 15
        %v421 = vsub.s32 0, %v420
        %v422 = vsel %vm416, %v421, %v420
        %vm423 = vcmp.lt.s32.totalorder %v317, 0
        %v424 = vsub.s32 0, %v317
        %v425 = vsel %vm423, %v424, %v317
        %v426 = vshrl.u32 %v425, 4
        %v427 = vand.u32 %v425, 15
        %v428 = vsub.s32 0, %v427
        %v429 = vsel %vm423, %v428, %v427
        %vm430 = vcmp.gt.s32.totalorder %v324, 0
        %vm431 = vcmp.gt.s32.totalorder %v331, 0
        %vm432 = vcmp.gt.s32.totalorder %v338, 0
        %vm433 = vcmp.gt.s32.totalorder %v345, 0
        %vm434 = vcmp.gt.s32.totalorder %v352, 0
        %vm435 = vcmp.gt.s32.totalorder %v359, 0
        %vm436 = vcmp.gt.s32.totalorder %v366, 0
        %vm437 = vcmp.gt.s32.totalorder %v373, 0
        %vm438 = vcmp.gt.s32.totalorder %v380, 0
        %vm439 = vcmp.gt.s32.totalorder %v387, 0
        %vm440 = vcmp.gt.s32.totalorder %v394, 0
        %vm441 = vcmp.gt.s32.totalorder %v401, 0
        %vm442 = vcmp.gt.s32.totalorder %v408, 0
        %vm443 = vcmp.gt.s32.totalorder %v415, 0
        %vm444 = vcmp.gt.s32.totalorder %v422, 0
        %vm445 = vcmp.gt.s32.totalorder %v429, 0
        %vm446 = vcmp.lt.s32.totalorder %v324, 15
        %vm447 = vcmp.lt.s32.totalorder %v331, 15
        %vm448 = vcmp.lt.s32.totalorder %v338, 15
        %vm449 = vcmp.lt.s32.totalorder %v345, 15
        %vm450 = vcmp.lt.s32.totalorder %v352, 15
        %vm451 = vcmp.lt.s32.totalorder %v359, 15
        %vm452 = vcmp.lt.s32.totalorder %v366, 15
        %vm453 = vcmp.lt.s32.totalorder %v373, 15
        %vm454 = vcmp.lt.s32.totalorder %v380, 15
        %vm455 = vcmp.lt.s32.totalorder %v387, 15
        %vm456 = vcmp.lt.s32.totalorder %v394, 15
        %vm457 = vcmp.lt.s32.totalorder %v401, 15
        %vm458 = vcmp.lt.s32.totalorder %v408, 15
        %vm459 = vcmp.lt.s32.totalorder %v415, 15
        %vm460 = vcmp.lt.s32.totalorder %v422, 15
        %vm461 = vcmp.lt.s32.totalorder %v429, 15
        %vm462 = vsmask.f32 256
        %v464 = vshrl.u32 %v293, 16
        %v466 = vrot.slane %v464, 7
        %v467 = vshll.u32 %v293, 16
        %v469 = vor.u32 %v466, %v467
        %v471 = vshrl.u32 %v294, 16
        %v473 = vrot.slane %v471, 7
        %v474 = vshll.u32 %v294, 16
        %v476 = vor.u32 %v473, %v474
        %v477 = vsel %vm462, %v466, %v476
        %v479 = vshrl.u32 %v295, 16
        %v481 = vrot.slane %v479, 7
        %v482 = vshll.u32 %v295, 16
        %v484 = vor.u32 %v481, %v482
        %v485 = vsel %vm462, %v473, %v484
        %v487 = vshrl.u32 %v296, 16
        %v489 = vrot.slane %v487, 7
        %v490 = vshll.u32 %v296, 16
        %v492 = vor.u32 %v489, %v490
        %v493 = vsel %vm462, %v481, %v492
        %v495 = vshrl.u32 %v297, 16
        %v497 = vrot.slane %v495, 7
        %v498 = vshll.u32 %v297, 16
        %v500 = vor.u32 %v497, %v498
        %v501 = vsel %vm462, %v489, %v500
        %v503 = vshrl.u32 %v298, 16
        %v505 = vrot.slane %v503, 7
        %v506 = vshll.u32 %v298, 16
        %v508 = vor.u32 %v505, %v506
        %v509 = vsel %vm462, %v497, %v508
        %v511 = vshrl.u32 %v299, 16
        %v513 = vrot.slane %v511, 7
        %v514 = vshll.u32 %v299, 16
        %v516 = vor.u32 %v513, %v514
        %v517 = vsel %vm462, %v505, %v516
        %v519 = vshrl.u32 %v300, 16
        %v521 = vrot.slane %v519, 7
        %v522 = vshll.u32 %v300, 16
        %v524 = vor.u32 %v521, %v522
        %v525 = vsel %vm462, %v513, %v524
        %vm534 = vcmask 1040384
        %vm535 = vmand %vm534, %vm462
        %v536 = vsel %vm535, 0, %v469
        %v537 = vsel %vm430, 1, 0
        %v538 = vsel %vm431, 1, 0
        %v539 = vsel %vm432, 1, 0
        %v540 = vsel %vm433, 1, 0
        %v541 = vsel %vm434, 1, 0
        %v542 = vsel %vm435, 1, 0
        %v543 = vsel %vm436, 1, 0
        %v544 = vsel %vm437, 1, 0
        %v545 = vsel %vm438, 1, 0
        %v546 = vsel %vm439, 1, 0
        %v547 = vsel %vm440, 1, 0
        %v548 = vsel %vm441, 1, 0
        %v549 = vsel %vm442, 1, 0
        %v550 = vsel %vm443, 1, 0
        %v551 = vsel %vm444, 1, 0
        %v552 = vsel %vm445, 1, 0
        %vm553 = vcmp.eq.s32.totalorder %v537, 1
        %vm554 = vcmp.eq.s32.totalorder %v538, 1
        %vm555 = vcmp.eq.s32.totalorder %v539, 1
        %vm556 = vcmp.eq.s32.totalorder %v540, 1
        %vm557 = vcmp.eq.s32.totalorder %v541, 1
        %vm558 = vcmp.eq.s32.totalorder %v542, 1
        %vm559 = vcmp.eq.s32.totalorder %v543, 1
        %vm560 = vcmp.eq.s32.totalorder %v544, 1
        %vm561 = vcmp.eq.s32.totalorder %v545, 1
        %vm562 = vcmp.eq.s32.totalorder %v546, 1
        %vm563 = vcmp.eq.s32.totalorder %v547, 1
        %vm564 = vcmp.eq.s32.totalorder %v548, 1
        %vm565 = vcmp.eq.s32.totalorder %v549, 1
        %vm566 = vcmp.eq.s32.totalorder %v550, 1
        %vm567 = vcmp.eq.s32.totalorder %v551, 1
        %vm568 = vcmp.eq.s32.totalorder %v552, 1
        %vm569 = vmpackc.low %vm553, %vm553
        %vm570 = vmpackc.low %vm554, %vm554
        %vm571 = vmpackc.low %vm555, %vm555
        %vm572 = vmpackc.low %vm556, %vm556
        %vm573 = vmpackc.low %vm557, %vm557
        %vm574 = vmpackc.low %vm558, %vm558
        %vm575 = vmpackc.low %vm559, %vm559
        %vm576 = vmpackc.low %vm560, %vm560
        %vm577 = vmpackc.low %vm561, %vm561
        %vm578 = vmpackc.low %vm562, %vm562
        %vm579 = vmpackc.low %vm563, %vm563
        %vm580 = vmpackc.low %vm564, %vm564
        %vm581 = vmpackc.low %vm565, %vm565
        %vm582 = vmpackc.low %vm566, %vm566
        %vm583 = vmpackc.low %vm567, %vm567
        %vm584 = vmpackc.low %vm568, %vm568
        %v585 = vsel %vm569, 65537, 0
        %v586 = vsel %vm570, 65537, 0
        %v587 = vsel %vm571, 65537, 0
        %v588 = vsel %vm572, 65537, 0
        %v589 = vsel %vm573, 65537, 0
        %v590 = vsel %vm574, 65537, 0
        %v591 = vsel %vm575, 65537, 0
        %v592 = vsel %vm576, 65537, 0
        %v593 = vsel %vm577, 65537, 0
        %v594 = vsel %vm578, 65537, 0
        %v595 = vsel %vm579, 65537, 0
        %v596 = vsel %vm580, 65537, 0
        %v597 = vsel %vm581, 65537, 0
        %v598 = vsel %vm582, 65537, 0
        %v599 = vsel %vm583, 65537, 0
        %v600 = vsel %vm584, 65537, 0
        %v601 = vunpack.c.l.b16 %v585
        %v602 = vunpack.c.l.b16 %v586
        %v603 = vunpack.c.l.b16 %v587
        %v604 = vunpack.c.l.b16 %v588
        %v605 = vunpack.c.l.b16 %v589
        %v606 = vunpack.c.l.b16 %v590
        %v607 = vunpack.c.l.b16 %v591
        %v608 = vunpack.c.l.b16 %v592
        %v609 = vunpack.c.l.b16 %v593
        %v610 = vunpack.c.l.b16 %v594
        %v611 = vunpack.c.l.b16 %v595
        %v612 = vunpack.c.l.b16 %v596
        %v613 = vunpack.c.l.b16 %v597
        %v614 = vunpack.c.l.b16 %v598
        %v615 = vunpack.c.l.b16 %v599
        %v616 = vunpack.c.l.b16 %v600
        %v617 = vpack.c.b16 %v602, %v601
        %v618 = vpack.c.b16 %v604, %v603
        %v619 = vpack.c.b16 %v606, %v605
        %v620 = vpack.c.b16 %v608, %v607
        %v621 = vpack.c.b16 %v610, %v609
        %v622 = vpack.c.b16 %v612, %v611
        %v623 = vpack.c.b16 %v614, %v613
        %v624 = vpack.c.b16 %v616, %v615
        %vm625 = vcmp.ne.s16.totalorder %v617, 0
        %vm626 = vcmp.ne.s16.totalorder %v618, 0
        %vm627 = vcmp.ne.s16.totalorder %v619, 0
        %vm628 = vcmp.ne.s16.totalorder %v620, 0
        %vm629 = vcmp.ne.s16.totalorder %v621, 0
        %vm630 = vcmp.ne.s16.totalorder %v622, 0
        %vm631 = vcmp.ne.s16.totalorder %v623, 0
        %vm632 = vcmp.ne.s16.totalorder %v624, 0
        %v633 = vsel %vm625, %v536, 0
        %v634 = vsel %vm626, %v477, 0
        %v635 = vsel %vm627, %v485, 0
        %v636 = vsel %vm628, %v493, 0
        %v637 = vsel %vm629, %v501, 0
        %v638 = vsel %vm630, %v509, 0
        %v639 = vsel %vm631, %v517, 0
        %v640 = vsel %vm632, %v525, 0
        %vm641 = vsmask.f32 7424
        %v642 = vrot.slane %v467, 1
        %v643 = vor.u32 %v464, %v642
        %v644 = vrot.slane %v474, 1
        %v645 = vsel %vm641, %v643, %v644
        %v646 = vor.u32 %v471, %v644
        %v647 = vrot.slane %v482, 1
        %v648 = vsel %vm641, %v646, %v647
        %v649 = vor.u32 %v479, %v647
        %v650 = vrot.slane %v490, 1
        %v651 = vsel %vm641, %v649, %v650
        %v652 = vor.u32 %v487, %v650
        %v653 = vrot.slane %v498, 1
        %v654 = vsel %vm641, %v652, %v653
        %v655 = vor.u32 %v495, %v653
        %v656 = vrot.slane %v506, 1
        %v657 = vsel %vm641, %v655, %v656
        %v658 = vor.u32 %v503, %v656
        %v659 = vrot.slane %v514, 1
        %v660 = vsel %vm641, %v658, %v659
        %v661 = vor.u32 %v511, %v659
        %v662 = vrot.slane %v522, 1
        %v663 = vsel %vm641, %v661, %v662
        %v664 = vor.u32 %v519, %v662
        %vm673 = vcmask 1047552
        %vm674 = vmand %vm673, %vm641
        %v675 = vsel %vm674, %v664, 0
        %v676 = vsel %vm446, 1, 0
        %v677 = vsel %vm447, 1, 0
        %v678 = vsel %vm448, 1, 0
        %v679 = vsel %vm449, 1, 0
        %v680 = vsel %vm450, 1, 0
        %v681 = vsel %vm451, 1, 0
        %v682 = vsel %vm452, 1, 0
        %v683 = vsel %vm453, 1, 0
        %v684 = vsel %vm454, 1, 0
        %v685 = vsel %vm455, 1, 0
        %v686 = vsel %vm456, 1, 0
        %v687 = vsel %vm457, 1, 0
        %v688 = vsel %vm458, 1, 0
        %v689 = vsel %vm459, 1, 0
        %v690 = vsel %vm460, 1, 0
        %v691 = vsel %vm461, 1, 0
        %vm692 = vcmp.eq.s32.totalorder %v676, 1
        %vm693 = vcmp.eq.s32.totalorder %v677, 1
        %vm694 = vcmp.eq.s32.totalorder %v678, 1
        %vm695 = vcmp.eq.s32.totalorder %v679, 1
        %vm696 = vcmp.eq.s32.totalorder %v680, 1
        %vm697 = vcmp.eq.s32.totalorder %v681, 1
        %vm698 = vcmp.eq.s32.totalorder %v682, 1
        %vm699 = vcmp.eq.s32.totalorder %v683, 1
        %vm700 = vcmp.eq.s32.totalorder %v684, 1
        %vm701 = vcmp.eq.s32.totalorder %v685, 1
        %vm702 = vcmp.eq.s32.totalorder %v686, 1
        %vm703 = vcmp.eq.s32.totalorder %v687, 1
        %vm704 = vcmp.eq.s32.totalorder %v688, 1
        %vm705 = vcmp.eq.s32.totalorder %v689, 1
        %vm706 = vcmp.eq.s32.totalorder %v690, 1
        %vm707 = vcmp.eq.s32.totalorder %v691, 1
        %vm708 = vmpackc.low %vm692, %vm692
        %vm709 = vmpackc.low %vm693, %vm693
        %vm710 = vmpackc.low %vm694, %vm694
        %vm711 = vmpackc.low %vm695, %vm695
        %vm712 = vmpackc.low %vm696, %vm696
        %vm713 = vmpackc.low %vm697, %vm697
        %vm714 = vmpackc.low %vm698, %vm698
        %vm715 = vmpackc.low %vm699, %vm699
        %vm716 = vmpackc.low %vm700, %vm700
        %vm717 = vmpackc.low %vm701, %vm701
        %vm718 = vmpackc.low %vm702, %vm702
        %vm719 = vmpackc.low %vm703, %vm703
        %vm720 = vmpackc.low %vm704, %vm704
        %vm721 = vmpackc.low %vm705, %vm705
        %vm722 = vmpackc.low %vm706, %vm706
        %vm723 = vmpackc.low %vm707, %vm707
        %v724 = vsel %vm708, 65537, 0
        %v725 = vsel %vm709, 65537, 0
        %v726 = vsel %vm710, 65537, 0
        %v727 = vsel %vm711, 65537, 0
        %v728 = vsel %vm712, 65537, 0
        %v729 = vsel %vm713, 65537, 0
        %v730 = vsel %vm714, 65537, 0
        %v731 = vsel %vm715, 65537, 0
        %v732 = vsel %vm716, 65537, 0
        %v733 = vsel %vm717, 65537, 0
        %v734 = vsel %vm718, 65537, 0
        %v735 = vsel %vm719, 65537, 0
        %v736 = vsel %vm720, 65537, 0
        %v737 = vsel %vm721, 65537, 0
        %v738 = vsel %vm722, 65537, 0
        %v739 = vsel %vm723, 65537, 0
        %v740 = vunpack.c.l.b16 %v724
        %v741 = vunpack.c.l.b16 %v725
        %v742 = vunpack.c.l.b16 %v726
        %v743 = vunpack.c.l.b16 %v727
        %v744 = vunpack.c.l.b16 %v728
        %v745 = vunpack.c.l.b16 %v729
        %v746 = vunpack.c.l.b16 %v730
        %v747 = vunpack.c.l.b16 %v731
        %v748 = vunpack.c.l.b16 %v732
        %v749 = vunpack.c.l.b16 %v733
        %v750 = vunpack.c.l.b16 %v734
        %v751 = vunpack.c.l.b16 %v735
        %v752 = vunpack.c.l.b16 %v736
        %v753 = vunpack.c.l.b16 %v737
        %v754 = vunpack.c.l.b16 %v738
        %v755 = vunpack.c.l.b16 %v739
        %v756 = vpack.c.b16 %v741, %v740
        %v757 = vpack.c.b16 %v743, %v742
        %v758 = vpack.c.b16 %v745, %v744
        %v759 = vpack.c.b16 %v747, %v746
        %v760 = vpack.c.b16 %v749, %v748
        %v761 = vpack.c.b16 %v751, %v750
        %v762 = vpack.c.b16 %v753, %v752
        %v763 = vpack.c.b16 %v755, %v754
        %vm764 = vcmp.ne.s16.totalorder %v756, 0
        %vm765 = vcmp.ne.s16.totalorder %v757, 0
        %vm766 = vcmp.ne.s16.totalorder %v758, 0
        %vm767 = vcmp.ne.s16.totalorder %v759, 0
        %vm768 = vcmp.ne.s16.totalorder %v760, 0
        %vm769 = vcmp.ne.s16.totalorder %v761, 0
        %vm770 = vcmp.ne.s16.totalorder %v762, 0
        %vm771 = vcmp.ne.s16.totalorder %v763, 0
        %v772 = vsel %vm764, %v645, 0
        %v773 = vsel %vm765, %v648, 0
        %v774 = vsel %vm766, %v651, 0
        %v775 = vsel %vm767, %v654, 0
        %v776 = vsel %vm768, %v657, 0
        %v777 = vsel %vm769, %v660, 0
        %v778 = vsel %vm770, %v663, 0
        %v779 = vsel %vm771, %v675, 0
        %v780 = vld [vmem:[#allocation5] sm:$0xf]
        %v781 = vld [vmem:[#allocation5 + $0x4] sm:$0xf]
        %v782 = vld [vmem:[#allocation5 + $0x8] sm:$0xf]
        %v783 = vld [vmem:[#allocation5 + $0xc] sm:$0xf]
        %v784 = vld [vmem:[#allocation5 + $0x10] sm:$0xf]
        %v785 = vld [vmem:[#allocation5 + $0x14] sm:$0xf]
        %v786 = vld [vmem:[#allocation5 + $0x18] sm:$0xf]
        %v787 = vld [vmem:[#allocation5 + $0x1c] sm:$0xf]
        %v788 = vld [vmem:[#allocation5 + $0x20] sm:$0xf]
        %v789 = vld [vmem:[#allocation5 + $0x24] sm:$0xf]
        %v790 = vld [vmem:[#allocation5 + $0x28] sm:$0xf]
        %v791 = vld [vmem:[#allocation5 + $0x2c] sm:$0xf]
        %v792 = vld [vmem:[#allocation5 + $0x30] sm:$0xf]
        %v793 = vld [vmem:[#allocation5 + $0x34] sm:$0xf]
        %v794 = vld [vmem:[#allocation5 + $0x38] sm:$0xf]
        %v795 = vld [vmem:[#allocation5 + $0x3c] sm:$0xf]
        %s796 = scalar_lea.vmem [#allocation5], 64
        %v797 = vld [vmem:[%s796] sm:$0xf]
        %v798 = vld [vmem:[%s796 + $0x4] sm:$0xf]
        %v799 = vld [vmem:[%s796 + $0x8] sm:$0xf]
        %v800 = vld [vmem:[%s796 + $0xc] sm:$0xf]
        %v801 = vld [vmem:[%s796 + $0x10] sm:$0xf]
        %v802 = vld [vmem:[%s796 + $0x14] sm:$0xf]
        %v803 = vld [vmem:[%s796 + $0x18] sm:$0xf]
        %v804 = vld [vmem:[%s796 + $0x1c] sm:$0xf]
        %v805 = vld [vmem:[%s796 + $0x20] sm:$0xf]
        %v806 = vld [vmem:[%s796 + $0x24] sm:$0xf]
        %v807 = vld [vmem:[%s796 + $0x28] sm:$0xf]
        %v808 = vld [vmem:[%s796 + $0x2c] sm:$0xf]
        %v809 = vld [vmem:[%s796 + $0x30] sm:$0xf]
        %v810 = vld [vmem:[%s796 + $0x34] sm:$0xf]
        %v811 = vld [vmem:[%s796 + $0x38] sm:$0xf]
        %v812 = vld [vmem:[%s796 + $0x3c] sm:$0xf]
        %v829 = vunpack.c.l.b16 %v797
        %v830 = vunpack.c.l.b16 %v798
        %v831 = vunpack.c.l.b16 %v799
        %v832 = vunpack.c.l.b16 %v800
        %v833 = vunpack.c.l.b16 %v801
        %v834 = vunpack.c.l.b16 %v802
        %v835 = vunpack.c.l.b16 %v803
        %v836 = vunpack.c.l.b16 %v804
        %v837 = vunpack.c.l.b16 %v805
        %v838 = vunpack.c.l.b16 %v806
        %v839 = vunpack.c.l.b16 %v807
        %v840 = vunpack.c.l.b16 %v808
        %v841 = vunpack.c.l.b16 %v809
        %v842 = vunpack.c.l.b16 %v810
        %v843 = vunpack.c.l.b16 %v811
        %v844 = vunpack.c.l.b16 %v812
        %v845 = vpack.c.b16 %v830, %v829
        %v846 = vpack.c.b16 %v832, %v831
        %v847 = vpack.c.b16 %v834, %v833
        %v848 = vpack.c.b16 %v836, %v835
        %v849 = vpack.c.b16 %v838, %v837
        %v850 = vpack.c.b16 %v840, %v839
        %v851 = vpack.c.b16 %v842, %v841
        %v852 = vpack.c.b16 %v844, %v843
        %861 = vmatprep.subr.bf16.mxu0 0
        %862 = vmatpush1.bf16.msra.mxu0 %v845
        %863 = vmatprep.subr.bf16.mxu0 0
        %864 = vmatpush1.bf16.msra.mxu0 %v846
        %865 = vmatprep.subr.bf16.mxu0 0
        %866 = vmatpush1.bf16.msra.mxu0 %v847
        %867 = vmatprep.subr.bf16.mxu0 0
        %868 = vmatpush1.bf16.msra.mxu0 %v848
        %869 = vmatprep.subr.bf16.mxu0 0
        %870 = vmatpush1.bf16.msra.mxu0 %v849
        %871 = vmatprep.subr.bf16.mxu0 0
        %872 = vmatpush1.bf16.msra.mxu0 %v850
        %873 = vmatprep.subr.bf16.mxu0 0
        %874 = vmatpush1.bf16.msra.mxu0 %v851
        %875 = vmatprep.subr.bf16.mxu0 0
        %876 = vmatpush1.bf16.msra.mxu0 %v852
        %877 = vmatprep.subr.bf16.mxu0 0
        %878 = vmatpush1.bf16.msra.mxu0 0
        %879 = vmatprep.subr.bf16.mxu0 0
        %880 = vmatpush1.bf16.msra.mxu0 0
        %881 = vmatprep.subr.bf16.mxu0 0
        %882 = vmatpush1.bf16.msra.mxu0 0
        %883 = vmatprep.subr.bf16.mxu0 0
        %884 = vmatpush1.bf16.msra.mxu0 0
        %885 = vmatprep.subr.bf16.mxu0 0
        %886 = vmatpush1.bf16.msra.mxu0 0
        %887 = vmatprep.subr.bf16.mxu0 0
        %888 = vmatpush1.bf16.msra.mxu0 0
        %889 = vmatprep.subr.bf16.mxu0 0
        %890 = vmatpush1.bf16.msra.mxu0 0
        %891 = vmatprep.subr.bf16.mxu0 0
        %892 = vmatpush1.bf16.msra.mxu0 0
        %893 = vmatprep.mubr.bf16.mxu0 0
        %894 = vmatmul.mubr.bf16.gmra.mrb[0].mxu0 %v293
        %v895 = vpop.f32.mrb[0].mxu0
        %v896 = vadd.f32 0.0, %v895
        %v897 = vpop.f32.mrb[0].mxu0
        %v898 = vpop.f32.mrb[0].mxu0
        %v899 = vadd.f32 0.0, %v898
        %v900 = vpop.f32.mrb[0].mxu0
        %901 = vmatprep.mubr.bf16.mxu0 0
        %902 = vmatmul.mubr.bf16.gmra.mrb[0].mxu0 %v294
        %v903 = vpop.f32.mrb[0].mxu0
        %v904 = vadd.f32 0.0, %v903
        %v905 = vpop.f32.mrb[0].mxu0
        %v906 = vpop.f32.mrb[0].mxu0
        %v907 = vadd.f32 0.0, %v906
        %v908 = vpop.f32.mrb[0].mxu0
        %909 = vmatprep.mubr.bf16.mxu0 0
        %910 = vmatmul.mubr.bf16.gmra.mrb[0].mxu0 %v295
        %v911 = vpop.f32.mrb[0].mxu0
        %v912 = vadd.f32 0.0, %v911
        %v913 = vpop.f32.mrb[0].mxu0
        %v914 = vpop.f32.mrb[0].mxu0
        %v915 = vadd.f32 0.0, %v914
        %v916 = vpop.f32.mrb[0].mxu0
        %917 = vmatprep.mubr.bf16.mxu0 0
        %918 = vmatmul.mubr.bf16.gmra.mrb[0].mxu0 %v296
        %v919 = vpop.f32.mrb[0].mxu0
        %v920 = vadd.f32 0.0, %v919
        %v921 = vpop.f32.mrb[0].mxu0
        %v922 = vpop.f32.mrb[0].mxu0
        %v923 = vadd.f32 0.0, %v922
        %v924 = vpop.f32.mrb[0].mxu0
        %925 = vmatprep.mubr.bf16.mxu0 0
        %926 = vmatmul.mubr.bf16.gmra.mrb[0].mxu0 %v297
        %v927 = vpop.f32.mrb[0].mxu0
        %v928 = vadd.f32 0.0, %v927
        %v929 = vpop.f32.mrb[0].mxu0
        %v930 = vpop.f32.mrb[0].mxu0
        %v931 = vadd.f32 0.0, %v930
        %v932 = vpop.f32.mrb[0].mxu0
        %933 = vmatprep.mubr.bf16.mxu0 0
        %934 = vmatmul.mubr.bf16.gmra.mrb[0].mxu0 %v298
        %v935 = vpop.f32.mrb[0].mxu0
        %v936 = vadd.f32 0.0, %v935
        %v937 = vpop.f32.mrb[0].mxu0
        %v938 = vpop.f32.mrb[0].mxu0
        %v939 = vadd.f32 0.0, %v938
        %v940 = vpop.f32.mrb[0].mxu0
        %941 = vmatprep.mubr.bf16.mxu0 0
        %942 = vmatmul.mubr.bf16.gmra.mrb[0].mxu0 %v299
        %v943 = vpop.f32.mrb[0].mxu0
        %v944 = vadd.f32 0.0, %v943
        %v945 = vpop.f32.mrb[0].mxu0
        %v946 = vpop.f32.mrb[0].mxu0
        %v947 = vadd.f32 0.0, %v946
        %v948 = vpop.f32.mrb[0].mxu0
        %949 = vmatprep.mubr.bf16.mxu0 0
        %950 = vmatmul.mubr.bf16.gmra.mrb[0].mxu0 %v300
        %v951 = vpop.f32.mrb[0].mxu0
        %v952 = vadd.f32 0.0, %v951
        %v953 = vpop.f32.mrb[0].mxu0
        %v954 = vpop.f32.mrb[0].mxu0
        %v955 = vadd.f32 0.0, %v954
        %v956 = vpop.f32.mrb[0].mxu0
        %957 = vdwg.mxu0
        %v974 = vunpack.c.l.b16 %v780
        %v975 = vunpack.c.l.b16 %v781
        %v976 = vunpack.c.l.b16 %v782
        %v977 = vunpack.c.l.b16 %v783
        %v978 = vunpack.c.l.b16 %v784
        %v979 = vunpack.c.l.b16 %v785
        %v980 = vunpack.c.l.b16 %v786
        %v981 = vunpack.c.l.b16 %v787
        %v982 = vunpack.c.l.b16 %v788
        %v983 = vunpack.c.l.b16 %v789
        %v984 = vunpack.c.l.b16 %v790
        %v985 = vunpack.c.l.b16 %v791
        %v986 = vunpack.c.l.b16 %v792
        %v987 = vunpack.c.l.b16 %v793
        %v988 = vunpack.c.l.b16 %v794
        %v989 = vunpack.c.l.b16 %v795
        %v990 = vpack.c.b16 %v975, %v974
        %v991 = vpack.c.b16 %v977, %v976
        %v992 = vpack.c.b16 %v979, %v978
        %v993 = vpack.c.b16 %v981, %v980
        %v994 = vpack.c.b16 %v983, %v982
        %v995 = vpack.c.b16 %v985, %v984
        %v996 = vpack.c.b16 %v987, %v986
        %v997 = vpack.c.b16 %v989, %v988
        %1006 = vmatprep.subr.bf16.mxu0 0
        %1007 = vmatpush1.bf16.msra.mxu0 %v990
        %1008 = vmatprep.subr.bf16.mxu0 0
        %1009 = vmatpush1.bf16.msra.mxu0 %v991
        %1010 = vmatprep.subr.bf16.mxu0 0
        %1011 = vmatpush1.bf16.msra.mxu0 %v992
        %1012 = vmatprep.subr.bf16.mxu0 0
        %1013 = vmatpush1.bf16.msra.mxu0 %v993
        %1014 = vmatprep.subr.bf16.mxu0 0
        %1015 = vmatpush1.bf16.msra.mxu0 %v994
        %1016 = vmatprep.subr.bf16.mxu0 0
        %1017 = vmatpush1.bf16.msra.mxu0 %v995
        %1018 = vmatprep.subr.bf16.mxu0 0
        %1019 = vmatpush1.bf16.msra.mxu0 %v996
        %1020 = vmatprep.subr.bf16.mxu0 0
        %1021 = vmatpush1.bf16.msra.mxu0 %v997
        %1022 = vmatprep.subr.bf16.mxu0 0
        %1023 = vmatpush1.bf16.msra.mxu0 0
        %1024 = vmatprep.subr.bf16.mxu0 0
        %1025 = vmatpush1.bf16.msra.mxu0 0
        %1026 = vmatprep.subr.bf16.mxu0 0
        %1027 = vmatpush1.bf16.msra.mxu0 0
        %1028 = vmatprep.subr.bf16.mxu0 0
        %1029 = vmatpush1.bf16.msra.mxu0 0
        %1030 = vmatprep.subr.bf16.mxu0 0
        %1031 = vmatpush1.bf16.msra.mxu0 0
        %1032 = vmatprep.subr.bf16.mxu0 0
        %1033 = vmatpush1.bf16.msra.mxu0 0
        %1034 = vmatprep.subr.bf16.mxu0 0
        %1035 = vmatpush1.bf16.msra.mxu0 0
        %1036 = vmatprep.subr.bf16.mxu0 0
        %1037 = vmatpush1.bf16.msra.mxu0 0
        %1038 = vmatprep.mubr.bf16.mxu0 0
        %1039 = vmatmul.mubr.bf16.gmra.mrb[0].mxu0 %v633
        %v1040 = vpop.f32.mrb[0].mxu0
        %v1041 = vadd.f32 %v896, %v1040
        %v1042 = vpop.f32.mrb[0].mxu0
        %v1043 = vpop.f32.mrb[0].mxu0
        %v1044 = vadd.f32 %v899, %v1043
        %v1045 = vpop.f32.mrb[0].mxu0
        %1046 = vmatprep.mubr.bf16.mxu0 0
        %1047 = vmatmul.mubr.bf16.gmra.mrb[0].mxu0 %v634
        %v1048 = vpop.f32.mrb[0].mxu0
        %v1049 = vadd.f32 %v904, %v1048
        %v1050 = vpop.f32.mrb[0].mxu0
        %v1051 = vpop.f32.mrb[0].mxu0
        %v1052 = vadd.f32 %v907, %v1051
        %v1053 = vpop.f32.mrb[0].mxu0
        %1054 = vmatprep.mubr.bf16.mxu0 0
        %1055 = vmatmul.mubr.bf16.gmra.mrb[0].mxu0 %v635
        %v1056 = vpop.f32.mrb[0].mxu0
        %v1057 = vadd.f32 %v912, %v1056
        %v1058 = vpop.f32.mrb[0].mxu0
        %v1059 = vpop.f32.mrb[0].mxu0
        %v1060 = vadd.f32 %v915, %v1059
        %v1061 = vpop.f32.mrb[0].mxu0
        %1062 = vmatprep.mubr.bf16.mxu0 0
        %1063 = vmatmul.mubr.bf16.gmra.mrb[0].mxu0 %v636
        %v1064 = vpop.f32.mrb[0].mxu0
        %v1065 = vadd.f32 %v920, %v1064
        %v1066 = vpop.f32.mrb[0].mxu0
        %v1067 = vpop.f32.mrb[0].mxu0
        %v1068 = vadd.f32 %v923, %v1067
        %v1069 = vpop.f32.mrb[0].mxu0
        %1070 = vmatprep.mubr.bf16.mxu0 0
        %1071 = vmatmul.mubr.bf16.gmra.mrb[0].mxu0 %v637
        %v1072 = vpop.f32.mrb[0].mxu0
        %v1073 = vadd.f32 %v928, %v1072
        %v1074 = vpop.f32.mrb[0].mxu0
        %v1075 = vpop.f32.mrb[0].mxu0
        %v1076 = vadd.f32 %v931, %v1075
        %v1077 = vpop.f32.mrb[0].mxu0
        %1078 = vmatprep.mubr.bf16.mxu0 0
        %1079 = vmatmul.mubr.bf16.gmra.mrb[0].mxu0 %v638
        %v1080 = vpop.f32.mrb[0].mxu0
        %v1081 = vadd.f32 %v936, %v1080
        %v1082 = vpop.f32.mrb[0].mxu0
        %v1083 = vpop.f32.mrb[0].mxu0
        %v1084 = vadd.f32 %v939, %v1083
        %v1085 = vpop.f32.mrb[0].mxu0
        %1086 = vmatprep.mubr.bf16.mxu0 0
        %1087 = vmatmul.mubr.bf16.gmra.mrb[0].mxu0 %v639
        %v1088 = vpop.f32.mrb[0].mxu0
        %v1089 = vadd.f32 %v944, %v1088
        %v1090 = vpop.f32.mrb[0].mxu0
        %v1091 = vpop.f32.mrb[0].mxu0
        %v1092 = vadd.f32 %v947, %v1091
        %v1093 = vpop.f32.mrb[0].mxu0
        %1094 = vmatprep.mubr.bf16.mxu0 0
        %1095 = vmatmul.mubr.bf16.gmra.mrb[0].mxu0 %v640
        %v1096 = vpop.f32.mrb[0].mxu0
        %v1097 = vadd.f32 %v952, %v1096
        %v1098 = vpop.f32.mrb[0].mxu0
        %v1099 = vpop.f32.mrb[0].mxu0
        %v1100 = vadd.f32 %v955, %v1099
        %v1101 = vpop.f32.mrb[0].mxu0
        %1102 = vdwg.mxu0
        %s1103 = scalar_lea.vmem [#allocation5], 128
        %v1104 = vld [vmem:[%s1103] sm:$0xf]
        %v1105 = vld [vmem:[%s1103 + $0x4] sm:$0xf]
        %v1106 = vld [vmem:[%s1103 + $0x8] sm:$0xf]
        %v1107 = vld [vmem:[%s1103 + $0xc] sm:$0xf]
        %v1108 = vld [vmem:[%s1103 + $0x10] sm:$0xf]
        %v1109 = vld [vmem:[%s1103 + $0x14] sm:$0xf]
        %v1110 = vld [vmem:[%s1103 + $0x18] sm:$0xf]
        %v1111 = vld [vmem:[%s1103 + $0x1c] sm:$0xf]
        %v1112 = vld [vmem:[%s1103 + $0x20] sm:$0xf]
        %v1113 = vld [vmem:[%s1103 + $0x24] sm:$0xf]
        %v1114 = vld [vmem:[%s1103 + $0x28] sm:$0xf]
        %v1115 = vld [vmem:[%s1103 + $0x2c] sm:$0xf]
        %v1116 = vld [vmem:[%s1103 + $0x30] sm:$0xf]
        %v1117 = vld [vmem:[%s1103 + $0x34] sm:$0xf]
        %v1118 = vld [vmem:[%s1103 + $0x38] sm:$0xf]
        %v1119 = vld [vmem:[%s1103 + $0x3c] sm:$0xf]
        %v1136 = vunpack.c.l.b16 %v1104
        %v1137 = vunpack.c.l.b16 %v1105
        %v1138 = vunpack.c.l.b16 %v1106
        %v1139 = vunpack.c.l.b16 %v1107
        %v1140 = vunpack.c.l.b16 %v1108
        %v1141 = vunpack.c.l.b16 %v1109
        %v1142 = vunpack.c.l.b16 %v1110
        %v1143 = vunpack.c.l.b16 %v1111
        %v1144 = vunpack.c.l.b16 %v1112
        %v1145 = vunpack.c.l.b16 %v1113
        %v1146 = vunpack.c.l.b16 %v1114
        %v1147 = vunpack.c.l.b16 %v1115
        %v1148 = vunpack.c.l.b16 %v1116
        %v1149 = vunpack.c.l.b16 %v1117
        %v1150 = vunpack.c.l.b16 %v1118
        %v1151 = vunpack.c.l.b16 %v1119
        %v1152 = vpack.c.b16 %v1137, %v1136
        %v1153 = vpack.c.b16 %v1139, %v1138
        %v1154 = vpack.c.b16 %v1141, %v1140
        %v1155 = vpack.c.b16 %v1143, %v1142
        %v1156 = vpack.c.b16 %v1145, %v1144
        %v1157 = vpack.c.b16 %v1147, %v1146
        %v1158 = vpack.c.b16 %v1149, %v1148
        %v1159 = vpack.c.b16 %v1151, %v1150
        %1168 = vmatprep.subr.bf16.mxu0 0
        %1169 = vmatpush1.bf16.msra.mxu0 %v1152
        %1170 = vmatprep.subr.bf16.mxu0 0
        %1171 = vmatpush1.bf16.msra.mxu0 %v1153
        %1172 = vmatprep.subr.bf16.mxu0 0
        %1173 = vmatpush1.bf16.msra.mxu0 %v1154
        %1174 = vmatprep.subr.bf16.mxu0 0
        %1175 = vmatpush1.bf16.msra.mxu0 %v1155
        %1176 = vmatprep.subr.bf16.mxu0 0
        %1177 = vmatpush1.bf16.msra.mxu0 %v1156
        %1178 = vmatprep.subr.bf16.mxu0 0
        %1179 = vmatpush1.bf16.msra.mxu0 %v1157
        %1180 = vmatprep.subr.bf16.mxu0 0
        %1181 = vmatpush1.bf16.msra.mxu0 %v1158
        %1182 = vmatprep.subr.bf16.mxu0 0
        %1183 = vmatpush1.bf16.msra.mxu0 %v1159
        %1184 = vmatprep.subr.bf16.mxu0 0
        %1185 = vmatpush1.bf16.msra.mxu0 0
        %1186 = vmatprep.subr.bf16.mxu0 0
        %1187 = vmatpush1.bf16.msra.mxu0 0
        %1188 = vmatprep.subr.bf16.mxu0 0
        %1189 = vmatpush1.bf16.msra.mxu0 0
        %1190 = vmatprep.subr.bf16.mxu0 0
        %1191 = vmatpush1.bf16.msra.mxu0 0
        %1192 = vmatprep.subr.bf16.mxu0 0
        %1193 = vmatpush1.bf16.msra.mxu0 0
        %1194 = vmatprep.subr.bf16.mxu0 0
        %1195 = vmatpush1.bf16.msra.mxu0 0
        %1196 = vmatprep.subr.bf16.mxu0 0
        %1197 = vmatpush1.bf16.msra.mxu0 0
        %1198 = vmatprep.subr.bf16.mxu0 0
        %1199 = vmatpush1.bf16.msra.mxu0 0
        %1200 = vmatprep.mubr.bf16.mxu0 0
        %1201 = vmatmul.mubr.bf16.gmra.mrb[0].mxu0 %v772
        %v1202 = vpop.f32.mrb[0].mxu0
        %v1203 = vadd.f32 0.0, %v1202
        %v1204 = vpop.f32.mrb[0].mxu0
        %v1205 = vpop.f32.mrb[0].mxu0
        %v1206 = vadd.f32 0.0, %v1205
        %v1207 = vpop.f32.mrb[0].mxu0
        %1208 = vmatprep.mubr.bf16.mxu0 0
        %1209 = vmatmul.mubr.bf16.gmra.mrb[0].mxu0 %v773
        %v1210 = vpop.f32.mrb[0].mxu0
        %v1211 = vadd.f32 0.0, %v1210
        %v1212 = vpop.f32.mrb[0].mxu0
        %v1213 = vpop.f32.mrb[0].mxu0
        %v1214 = vadd.f32 0.0, %v1213
        %v1215 = vpop.f32.mrb[0].mxu0
        %1216 = vmatprep.mubr.bf16.mxu0 0
        %1217 = vmatmul.mubr.bf16.gmra.mrb[0].mxu0 %v774
        %v1218 = vpop.f32.mrb[0].mxu0
        %v1219 = vadd.f32 0.0, %v1218
        %v1220 = vpop.f32.mrb[0].mxu0
        %v1221 = vpop.f32.mrb[0].mxu0
        %v1222 = vadd.f32 0.0, %v1221
        %v1223 = vpop.f32.mrb[0].mxu0
        %1224 = vmatprep.mubr.bf16.mxu0 0
        %1225 = vmatmul.mubr.bf16.gmra.mrb[0].mxu0 %v775
        %v1226 = vpop.f32.mrb[0].mxu0
        %v1227 = vadd.f32 0.0, %v1226
        %v1228 = vpop.f32.mrb[0].mxu0
        %v1229 = vpop.f32.mrb[0].mxu0
        %v1230 = vadd.f32 0.0, %v1229
        %v1231 = vpop.f32.mrb[0].mxu0
        %1232 = vmatprep.mubr.bf16.mxu0 0
        %1233 = vmatmul.mubr.bf16.gmra.mrb[0].mxu0 %v776
        %v1234 = vpop.f32.mrb[0].mxu0
        %v1235 = vadd.f32 0.0, %v1234
        %v1236 = vpop.f32.mrb[0].mxu0
        %v1237 = vpop.f32.mrb[0].mxu0
        %v1238 = vadd.f32 0.0, %v1237
        %v1239 = vpop.f32.mrb[0].mxu0
        %1240 = vmatprep.mubr.bf16.mxu0 0
        %1241 = vmatmul.mubr.bf16.gmra.mrb[0].mxu0 %v777
        %v1242 = vpop.f32.mrb[0].mxu0
        %v1243 = vadd.f32 0.0, %v1242
        %v1244 = vpop.f32.mrb[0].mxu0
        %v1245 = vpop.f32.mrb[0].mxu0
        %v1246 = vadd.f32 0.0, %v1245
        %v1247 = vpop.f32.mrb[0].mxu0
        %1248 = vmatprep.mubr.bf16.mxu0 0
        %1249 = vmatmul.mubr.bf16.gmra.mrb[0].mxu0 %v778
        %v1250 = vpop.f32.mrb[0].mxu0
        %v1251 = vadd.f32 0.0, %v1250
        %v1252 = vpop.f32.mrb[0].mxu0
        %v1253 = vpop.f32.mrb[0].mxu0
        %v1254 = vadd.f32 0.0, %v1253
        %v1255 = vpop.f32.mrb[0].mxu0
        %1256 = vmatprep.mubr.bf16.mxu0 0
        %1257 = vmatmul.mubr.bf16.gmra.mrb[0].mxu0 %v779
        %v1258 = vpop.f32.mrb[0].mxu0
        %v1259 = vadd.f32 0.0, %v1258
        %v1260 = vpop.f32.mrb[0].mxu0
        %v1261 = vpop.f32.mrb[0].mxu0
        %v1262 = vadd.f32 0.0, %v1261
        %v1263 = vpop.f32.mrb[0].mxu0
        %1264 = vdwg.mxu0
        %v1265 = vadd.f32 %v1041, %v1203
        %v1266 = vadd.f32 %v1044, %v1206
        %v1267 = vadd.f32 %v1049, %v1211
        %v1268 = vadd.f32 %v1052, %v1214
        %v1269 = vadd.f32 %v1057, %v1219
        %v1270 = vadd.f32 %v1060, %v1222
        %v1271 = vadd.f32 %v1065, %v1227
        %v1272 = vadd.f32 %v1068, %v1230
        %v1273 = vadd.f32 %v1073, %v1235
        %v1274 = vadd.f32 %v1076, %v1238
        %v1275 = vadd.f32 %v1081, %v1243
        %v1276 = vadd.f32 %v1084, %v1246
        %v1277 = vadd.f32 %v1089, %v1251
        %v1278 = vadd.f32 %v1092, %v1254
        %v1279 = vadd.f32 %v1097, %v1259
        %v1280 = vadd.f32 %v1100, %v1262
        %v1281 = vld [vmem:[%s2] sm:$0x1]
        %v1283 = vlaneseq
        %v1284 = vshrl.u32 %v1283, 7
        %v1285 = vsub.s32 0, %v1284
        %v1286 = vrot.slane %v1281, %v1285
        %v1288 = vadd.f32 %v1265, %v1286
        %v1289 = vadd.f32 %v1266, %v1286
        %v1290 = vadd.f32 %v1267, %v1286
        %v1291 = vadd.f32 %v1268, %v1286
        %v1292 = vadd.f32 %v1269, %v1286
        %v1293 = vadd.f32 %v1270, %v1286
        %v1294 = vadd.f32 %v1271, %v1286
        %v1295 = vadd.f32 %v1272, %v1286
        %v1296 = vadd.f32 %v1273, %v1286
        %v1297 = vadd.f32 %v1274, %v1286
        %v1298 = vadd.f32 %v1275, %v1286
        %v1299 = vadd.f32 %v1276, %v1286
        %v1300 = vadd.f32 %v1277, %v1286
        %v1301 = vadd.f32 %v1278, %v1286
        %v1302 = vadd.f32 %v1279, %v1286
        %v1303 = vadd.f32 %v1280, %v1286
        %v1304 = vmax.f32 %v1288, 0.0
        %v1305 = vmax.f32 %v1289, 0.0
        %v1306 = vmax.f32 %v1290, 0.0
        %v1307 = vmax.f32 %v1291, 0.0
        %v1308 = vmax.f32 %v1292, 0.0
        %v1309 = vmax.f32 %v1293, 0.0
        %v1310 = vmax.f32 %v1294, 0.0
        %v1311 = vmax.f32 %v1295, 0.0
        %v1312 = vmax.f32 %v1296, 0.0
        %v1313 = vmax.f32 %v1297, 0.0
        %v1314 = vmax.f32 %v1298, 0.0
        %v1315 = vmax.f32 %v1299, 0.0
        %v1316 = vmax.f32 %v1300, 0.0
        %v1317 = vmax.f32 %v1301, 0.0
        %v1318 = vmax.f32 %v1302, 0.0
        %v1319 = vmax.f32 %v1303, 0.0
        %v1320 = vpack.c.bf16 %v1305, %v1304
        %v1321 = vpack.c.bf16 %v1307, %v1306
        %v1322 = vpack.c.bf16 %v1309, %v1308
        %v1323 = vpack.c.bf16 %v1311, %v1310
        %v1324 = vpack.c.bf16 %v1313, %v1312
        %v1325 = vpack.c.bf16 %v1315, %v1314
        %v1326 = vpack.c.bf16 %v1317, %v1316
        %v1327 = vpack.c.bf16 %v1319, %v1318
        %v1329 = vshrl.u32 %v1320, 16
        %v1331 = vrot.slane %v1329, 7
        %v1332 = vshll.u32 %v1320, 16
        %v1334 = vor.u32 %v1331, %v1332
        %v1336 = vshrl.u32 %v1321, 16
        %v1338 = vrot.slane %v1336, 7
        %v1339 = vshll.u32 %v1321, 16
        %v1341 = vor.u32 %v1338, %v1339
        %v1342 = vsel %vm462, %v1331, %v1341
        %v1344 = vshrl.u32 %v1322, 16
        %v1346 = vrot.slane %v1344, 7
        %v1347 = vshll.u32 %v1322, 16
        %v1349 = vor.u32 %v1346, %v1347
        %v1350 = vsel %vm462, %v1338, %v1349
        %v1352 = vshrl.u32 %v1323, 16
        %v1354 = vrot.slane %v1352, 7
        %v1355 = vshll.u32 %v1323, 16
        %v1357 = vor.u32 %v1354, %v1355
        %v1358 = vsel %vm462, %v1346, %v1357
        %v1360 = vshrl.u32 %v1324, 16
        %v1362 = vrot.slane %v1360, 7
        %v1363 = vshll.u32 %v1324, 16
        %v1365 = vor.u32 %v1362, %v1363
        %v1366 = vsel %vm462, %v1354, %v1365
        %v1368 = vshrl.u32 %v1325, 16
        %v1370 = vrot.slane %v1368, 7
        %v1371 = vshll.u32 %v1325, 16
        %v1373 = vor.u32 %v1370, %v1371
        %v1374 = vsel %vm462, %v1362, %v1373
        %v1376 = vshrl.u32 %v1326, 16
        %v1378 = vrot.slane %v1376, 7
        %v1379 = vshll.u32 %v1326, 16
        %v1381 = vor.u32 %v1378, %v1379
        %v1382 = vsel %vm462, %v1370, %v1381
        %v1384 = vshrl.u32 %v1327, 16
        %v1386 = vrot.slane %v1384, 7
        %v1387 = vshll.u32 %v1327, 16
        %v1389 = vor.u32 %v1386, %v1387
        %v1390 = vsel %vm462, %v1378, %v1389
        %v1399 = vsel %vm535, 0, %v1334
        %v1400 = vsel %vm625, %v1399, 0
        %v1401 = vsel %vm626, %v1342, 0
        %v1402 = vsel %vm627, %v1350, 0
        %v1403 = vsel %vm628, %v1358, 0
        %v1404 = vsel %vm629, %v1366, 0
        %v1405 = vsel %vm630, %v1374, 0
        %v1406 = vsel %vm631, %v1382, 0
        %v1407 = vsel %vm632, %v1390, 0
        %v1408 = vrot.slane %v1332, 1
        %v1409 = vor.u32 %v1329, %v1408
        %v1410 = vrot.slane %v1339, 1
        %v1411 = vsel %vm641, %v1409, %v1410
        %v1412 = vor.u32 %v1336, %v1410
        %v1413 = vrot.slane %v1347, 1
        %v1414 = vsel %vm641, %v1412, %v1413
        %v1415 = vor.u32 %v1344, %v1413
        %v1416 = vrot.slane %v1355, 1
        %v1417 = vsel %vm641, %v1415, %v1416
        %v1418 = vor.u32 %v1352, %v1416
        %v1419 = vrot.slane %v1363, 1
        %v1420 = vsel %vm641, %v1418, %v1419
        %v1421 = vor.u32 %v1360, %v1419
        %v1422 = vrot.slane %v1371, 1
        %v1423 = vsel %vm641, %v1421, %v1422
        %v1424 = vor.u32 %v1368, %v1422
        %v1425 = vrot.slane %v1379, 1
        %v1426 = vsel %vm641, %v1424, %v1425
        %v1427 = vor.u32 %v1376, %v1425
        %v1428 = vrot.slane %v1387, 1
        %v1429 = vsel %vm641, %v1427, %v1428
        %v1430 = vor.u32 %v1384, %v1428
        %v1439 = vsel %vm674, %v1430, 0
        %v1440 = vsel %vm764, %v1411, 0
        %v1441 = vsel %vm765, %v1414, 0
        %v1442 = vsel %vm766, %v1417, 0
        %v1443 = vsel %vm767, %v1420, 0
        %v1444 = vsel %vm768, %v1423, 0
        %v1445 = vsel %vm769, %v1426, 0
        %v1446 = vsel %vm770, %v1429, 0
        %v1447 = vsel %vm771, %v1439, 0
        %v1448 = vld [vmem:[#allocation7] sm:$0xf]
        %v1449 = vld [vmem:[#allocation7 + $0x4] sm:$0xf]
        %v1450 = vld [vmem:[#allocation7 + $0x8] sm:$0xf]
        %v1451 = vld [vmem:[#allocation7 + $0xc] sm:$0xf]
        %v1452 = vld [vmem:[#allocation7 + $0x10] sm:$0xf]
        %v1453 = vld [vmem:[#allocation7 + $0x14] sm:$0xf]
        %v1454 = vld [vmem:[#allocation7 + $0x18] sm:$0xf]
        %v1455 = vld [vmem:[#allocation7 + $0x1c] sm:$0xf]
        %v1456 = vld [vmem:[#allocation7 + $0x20] sm:$0xf]
        %v1457 = vld [vmem:[#allocation7 + $0x24] sm:$0xf]
        %v1458 = vld [vmem:[#allocation7 + $0x28] sm:$0xf]
        %v1459 = vld [vmem:[#allocation7 + $0x2c] sm:$0xf]
        %v1460 = vld [vmem:[#allocation7 + $0x30] sm:$0xf]
        %v1461 = vld [vmem:[#allocation7 + $0x34] sm:$0xf]
        %v1462 = vld [vmem:[#allocation7 + $0x38] sm:$0xf]
        %v1463 = vld [vmem:[#allocation7 + $0x3c] sm:$0xf]
        %s1464 = scalar_lea.vmem [#allocation7], 64
        %v1465 = vld [vmem:[%s1464] sm:$0xf]
        %v1466 = vld [vmem:[%s1464 + $0x4] sm:$0xf]
        %v1467 = vld [vmem:[%s1464 + $0x8] sm:$0xf]
        %v1468 = vld [vmem:[%s1464 + $0xc] sm:$0xf]
        %v1469 = vld [vmem:[%s1464 + $0x10] sm:$0xf]
        %v1470 = vld [vmem:[%s1464 + $0x14] sm:$0xf]
        %v1471 = vld [vmem:[%s1464 + $0x18] sm:$0xf]
        %v1472 = vld [vmem:[%s1464 + $0x1c] sm:$0xf]
        %v1473 = vld [vmem:[%s1464 + $0x20] sm:$0xf]
        %v1474 = vld [vmem:[%s1464 + $0x24] sm:$0xf]
        %v1475 = vld [vmem:[%s1464 + $0x28] sm:$0xf]
        %v1476 = vld [vmem:[%s1464 + $0x2c] sm:$0xf]
        %v1477 = vld [vmem:[%s1464 + $0x30] sm:$0xf]
        %v1478 = vld [vmem:[%s1464 + $0x34] sm:$0xf]
        %v1479 = vld [vmem:[%s1464 + $0x38] sm:$0xf]
        %v1480 = vld [vmem:[%s1464 + $0x3c] sm:$0xf]
        %v1497 = vunpack.c.l.b16 %v1465
        %v1498 = vunpack.c.l.b16 %v1466
        %v1499 = vunpack.c.l.b16 %v1467
        %v1500 = vunpack.c.l.b16 %v1468
        %v1501 = vunpack.c.l.b16 %v1469
        %v1502 = vunpack.c.l.b16 %v1470
        %v1503 = vunpack.c.l.b16 %v1471
        %v1504 = vunpack.c.l.b16 %v1472
        %v1505 = vunpack.c.l.b16 %v1473
        %v1506 = vunpack.c.l.b16 %v1474
        %v1507 = vunpack.c.l.b16 %v1475
        %v1508 = vunpack.c.l.b16 %v1476
        %v1509 = vunpack.c.l.b16 %v1477
        %v1510 = vunpack.c.l.b16 %v1478
        %v1511 = vunpack.c.l.b16 %v1479
        %v1512 = vunpack.c.l.b16 %v1480
        %v1513 = vpack.c.b16 %v1498, %v1497
        %v1514 = vpack.c.b16 %v1500, %v1499
        %v1515 = vpack.c.b16 %v1502, %v1501
        %v1516 = vpack.c.b16 %v1504, %v1503
        %v1517 = vpack.c.b16 %v1506, %v1505
        %v1518 = vpack.c.b16 %v1508, %v1507
        %v1519 = vpack.c.b16 %v1510, %v1509
        %v1520 = vpack.c.b16 %v1512, %v1511
        %1529 = vmatprep.subr.bf16.mxu0 0
        %1530 = vmatpush1.bf16.msra.mxu0 %v1513
        %1531 = vmatprep.subr.bf16.mxu0 0
        %1532 = vmatpush1.bf16.msra.mxu0 %v1514
        %1533 = vmatprep.subr.bf16.mxu0 0
        %1534 = vmatpush1.bf16.msra.mxu0 %v1515
        %1535 = vmatprep.subr.bf16.mxu0 0
        %1536 = vmatpush1.bf16.msra.mxu0 %v1516
        %1537 = vmatprep.subr.bf16.mxu0 0
        %1538 = vmatpush1.bf16.msra.mxu0 %v1517
        %1539 = vmatprep.subr.bf16.mxu0 0
        %1540 = vmatpush1.bf16.msra.mxu0 %v1518
        %1541 = vmatprep.subr.bf16.mxu0 0
        %1542 = vmatpush1.bf16.msra.mxu0 %v1519
        %1543 = vmatprep.subr.bf16.mxu0 0
        %1544 = vmatpush1.bf16.msra.mxu0 %v1520
        %1545 = vmatprep.subr.bf16.mxu0 0
        %1546 = vmatpush1.bf16.msra.mxu0 0
        %1547 = vmatprep.subr.bf16.mxu0 0
        %1548 = vmatpush1.bf16.msra.mxu0 0
        %1549 = vmatprep.subr.bf16.mxu0 0
        %1550 = vmatpush1.bf16.msra.mxu0 0
        %1551 = vmatprep.subr.bf16.mxu0 0
        %1552 = vmatpush1.bf16.msra.mxu0 0
        %1553 = vmatprep.subr.bf16.mxu0 0
        %1554 = vmatpush1.bf16.msra.mxu0 0
        %1555 = vmatprep.subr.bf16.mxu0 0
        %1556 = vmatpush1.bf16.msra.mxu0 0
        %1557 = vmatprep.subr.bf16.mxu0 0
        %1558 = vmatpush1.bf16.msra.mxu0 0
        %1559 = vmatprep.subr.bf16.mxu0 0
        %1560 = vmatpush1.bf16.msra.mxu0 0
        %1561 = vmatprep.mubr.bf16.mxu0 0
        %1562 = vmatmul.mubr.bf16.gmra.mrb[0].mxu0 %v1320
        %v1563 = vpop.f32.mrb[0].mxu0
        %v1564 = vadd.f32 0.0, %v1563
        %v1565 = vpop.f32.mrb[0].mxu0
        %v1566 = vpop.f32.mrb[0].mxu0
        %v1567 = vadd.f32 0.0, %v1566
        %v1568 = vpop.f32.mrb[0].mxu0
        %1569 = vmatprep.mubr.bf16.mxu0 0
        %1570 = vmatmul.mubr.bf16.gmra.mrb[0].mxu0 %v1321
        %v1571 = vpop.f32.mrb[0].mxu0
        %v1572 = vadd.f32 0.0, %v1571
        %v1573 = vpop.f32.mrb[0].mxu0
        %v1574 = vpop.f32.mrb[0].mxu0
        %v1575 = vadd.f32 0.0, %v1574
        %v1576 = vpop.f32.mrb[0].mxu0
        %1577 = vmatprep.mubr.bf16.mxu0 0
        %1578 = vmatmul.mubr.bf16.gmra.mrb[0].mxu0 %v1322
        %v1579 = vpop.f32.mrb[0].mxu0
        %v1580 = vadd.f32 0.0, %v1579
        %v1581 = vpop.f32.mrb[0].mxu0
        %v1582 = vpop.f32.mrb[0].mxu0
        %v1583 = vadd.f32 0.0, %v1582
        %v1584 = vpop.f32.mrb[0].mxu0
        %1585 = vmatprep.mubr.bf16.mxu0 0
        %1586 = vmatmul.mubr.bf16.gmra.mrb[0].mxu0 %v1323
        %v1587 = vpop.f32.mrb[0].mxu0
        %v1588 = vadd.f32 0.0, %v1587
        %v1589 = vpop.f32.mrb[0].mxu0
        %v1590 = vpop.f32.mrb[0].mxu0
        %v1591 = vadd.f32 0.0, %v1590
        %v1592 = vpop.f32.mrb[0].mxu0
        %1593 = vmatprep.mubr.bf16.mxu0 0
        %1594 = vmatmul.mubr.bf16.gmra.mrb[0].mxu0 %v1324
        %v1595 = vpop.f32.mrb[0].mxu0
        %v1596 = vadd.f32 0.0, %v1595
        %v1597 = vpop.f32.mrb[0].mxu0
        %v1598 = vpop.f32.mrb[0].mxu0
        %v1599 = vadd.f32 0.0, %v1598
        %v1600 = vpop.f32.mrb[0].mxu0
        %1601 = vmatprep.mubr.bf16.mxu0 0
        %1602 = vmatmul.mubr.bf16.gmra.mrb[0].mxu0 %v1325
        %v1603 = vpop.f32.mrb[0].mxu0
        %v1604 = vadd.f32 0.0, %v1603
        %v1605 = vpop.f32.mrb[0].mxu0
        %v1606 = vpop.f32.mrb[0].mxu0
        %v1607 = vadd.f32 0.0, %v1606
        %v1608 = vpop.f32.mrb[0].mxu0
        %1609 = vmatprep.mubr.bf16.mxu0 0
        %1610 = vmatmul.mubr.bf16.gmra.mrb[0].mxu0 %v1326
        %v1611 = vpop.f32.mrb[0].mxu0
        %v1612 = vadd.f32 0.0, %v1611
        %v1613 = vpop.f32.mrb[0].mxu0
        %v1614 = vpop.f32.mrb[0].mxu0
        %v1615 = vadd.f32 0.0, %v1614
        %v1616 = vpop.f32.mrb[0].mxu0
        %1617 = vmatprep.mubr.bf16.mxu0 0
        %1618 = vmatmul.mubr.bf16.gmra.mrb[0].mxu0 %v1327
        %v1619 = vpop.f32.mrb[0].mxu0
        %v1620 = vadd.f32 0.0, %v1619
        %v1621 = vpop.f32.mrb[0].mxu0
        %v1622 = vpop.f32.mrb[0].mxu0
        %v1623 = vadd.f32 0.0, %v1622
        %v1624 = vpop.f32.mrb[0].mxu0
        %1625 = vdwg.mxu0
        %v1642 = vunpack.c.l.b16 %v1448
        %v1643 = vunpack.c.l.b16 %v1449
        %v1644 = vunpack.c.l.b16 %v1450
        %v1645 = vunpack.c.l.b16 %v1451
        %v1646 = vunpack.c.l.b16 %v1452
        %v1647 = vunpack.c.l.b16 %v1453
        %v1648 = vunpack.c.l.b16 %v1454
        %v1649 = vunpack.c.l.b16 %v1455
        %v1650 = vunpack.c.l.b16 %v1456
        %v1651 = vunpack.c.l.b16 %v1457
        %v1652 = vunpack.c.l.b16 %v1458
        %v1653 = vunpack.c.l.b16 %v1459
        %v1654 = vunpack.c.l.b16 %v1460
        %v1655 = vunpack.c.l.b16 %v1461
        %v1656 = vunpack.c.l.b16 %v1462
        %v1657 = vunpack.c.l.b16 %v1463
        %v1658 = vpack.c.b16 %v1643, %v1642
        %v1659 = vpack.c.b16 %v1645, %v1644
        %v1660 = vpack.c.b16 %v1647, %v1646
        %v1661 = vpack.c.b16 %v1649, %v1648
        %v1662 = vpack.c.b16 %v1651, %v1650
        %v1663 = vpack.c.b16 %v1653, %v1652
        %v1664 = vpack.c.b16 %v1655, %v1654
        %v1665 = vpack.c.b16 %v1657, %v1656
        %1674 = vmatprep.subr.bf16.mxu0 0
        %1675 = vmatpush1.bf16.msra.mxu0 %v1658
        %1676 = vmatprep.subr.bf16.mxu0 0
        %1677 = vmatpush1.bf16.msra.mxu0 %v1659
        %1678 = vmatprep.subr.bf16.mxu0 0
        %1679 = vmatpush1.bf16.msra.mxu0 %v1660
        %1680 = vmatprep.subr.bf16.mxu0 0
        %1681 = vmatpush1.bf16.msra.mxu0 %v1661
        %1682 = vmatprep.subr.bf16.mxu0 0
        %1683 = vmatpush1.bf16.msra.mxu0 %v1662
        %1684 = vmatprep.subr.bf16.mxu0 0
        %1685 = vmatpush1.bf16.msra.mxu0 %v1663
        %1686 = vmatprep.subr.bf16.mxu0 0
        %1687 = vmatpush1.bf16.msra.mxu0 %v1664
        %1688 = vmatprep.subr.bf16.mxu0 0
        %1689 = vmatpush1.bf16.msra.mxu0 %v1665
        %1690 = vmatprep.subr.bf16.mxu0 0
        %1691 = vmatpush1.bf16.msra.mxu0 0
        %1692 = vmatprep.subr.bf16.mxu0 0
        %1693 = vmatpush1.bf16.msra.mxu0 0
        %1694 = vmatprep.subr.bf16.mxu0 0
        %1695 = vmatpush1.bf16.msra.mxu0 0
        %1696 = vmatprep.subr.bf16.mxu0 0
        %1697 = vmatpush1.bf16.msra.mxu0 0
        %1698 = vmatprep.subr.bf16.mxu0 0
        %1699 = vmatpush1.bf16.msra.mxu0 0
        %1700 = vmatprep.subr.bf16.mxu0 0
        %1701 = vmatpush1.bf16.msra.mxu0 0
        %1702 = vmatprep.subr.bf16.mxu0 0
        %1703 = vmatpush1.bf16.msra.mxu0 0
        %1704 = vmatprep.subr.bf16.mxu0 0
        %1705 = vmatpush1.bf16.msra.mxu0 0
        %1706 = vmatprep.mubr.bf16.mxu0 0
        %1707 = vmatmul.mubr.bf16.gmra.mrb[0].mxu0 %v1400
        %v1708 = vpop.f32.mrb[0].mxu0
        %v1709 = vadd.f32 %v1564, %v1708
        %v1710 = vpop.f32.mrb[0].mxu0
        %v1711 = vpop.f32.mrb[0].mxu0
        %v1712 = vadd.f32 %v1567, %v1711
        %v1713 = vpop.f32.mrb[0].mxu0
        %1714 = vmatprep.mubr.bf16.mxu0 0
        %1715 = vmatmul.mubr.bf16.gmra.mrb[0].mxu0 %v1401
        %v1716 = vpop.f32.mrb[0].mxu0
        %v1717 = vadd.f32 %v1572, %v1716
        %v1718 = vpop.f32.mrb[0].mxu0
        %v1719 = vpop.f32.mrb[0].mxu0
        %v1720 = vadd.f32 %v1575, %v1719
        %v1721 = vpop.f32.mrb[0].mxu0
        %1722 = vmatprep.mubr.bf16.mxu0 0
        %1723 = vmatmul.mubr.bf16.gmra.mrb[0].mxu0 %v1402
        %v1724 = vpop.f32.mrb[0].mxu0
        %v1725 = vadd.f32 %v1580, %v1724
        %v1726 = vpop.f32.mrb[0].mxu0
        %v1727 = vpop.f32.mrb[0].mxu0
        %v1728 = vadd.f32 %v1583, %v1727
        %v1729 = vpop.f32.mrb[0].mxu0
        %1730 = vmatprep.mubr.bf16.mxu0 0
        %1731 = vmatmul.mubr.bf16.gmra.mrb[0].mxu0 %v1403
        %v1732 = vpop.f32.mrb[0].mxu0
        %v1733 = vadd.f32 %v1588, %v1732
        %v1734 = vpop.f32.mrb[0].mxu0
        %v1735 = vpop.f32.mrb[0].mxu0
        %v1736 = vadd.f32 %v1591, %v1735
        %v1737 = vpop.f32.mrb[0].mxu0
        %1738 = vmatprep.mubr.bf16.mxu0 0
        %1739 = vmatmul.mubr.bf16.gmra.mrb[0].mxu0 %v1404
        %v1740 = vpop.f32.mrb[0].mxu0
        %v1741 = vadd.f32 %v1596, %v1740
        %v1742 = vpop.f32.mrb[0].mxu0
        %v1743 = vpop.f32.mrb[0].mxu0
        %v1744 = vadd.f32 %v1599, %v1743
        %v1745 = vpop.f32.mrb[0].mxu0
        %1746 = vmatprep.mubr.bf16.mxu0 0
        %1747 = vmatmul.mubr.bf16.gmra.mrb[0].mxu0 %v1405
        %v1748 = vpop.f32.mrb[0].mxu0
        %v1749 = vadd.f32 %v1604, %v1748
        %v1750 = vpop.f32.mrb[0].mxu0
        %v1751 = vpop.f32.mrb[0].mxu0
        %v1752 = vadd.f32 %v1607, %v1751
        %v1753 = vpop.f32.mrb[0].mxu0
        %1754 = vmatprep.mubr.bf16.mxu0 0
        %1755 = vmatmul.mubr.bf16.gmra.mrb[0].mxu0 %v1406
        %v1756 = vpop.f32.mrb[0].mxu0
        %v1757 = vadd.f32 %v1612, %v1756
        %v1758 = vpop.f32.mrb[0].mxu0
        %v1759 = vpop.f32.mrb[0].mxu0
        %v1760 = vadd.f32 %v1615, %v1759
        %v1761 = vpop.f32.mrb[0].mxu0
        %1762 = vmatprep.mubr.bf16.mxu0 0
        %1763 = vmatmul.mubr.bf16.gmra.mrb[0].mxu0 %v1407
        %v1764 = vpop.f32.mrb[0].mxu0
        %v1765 = vadd.f32 %v1620, %v1764
        %v1766 = vpop.f32.mrb[0].mxu0
        %v1767 = vpop.f32.mrb[0].mxu0
        %v1768 = vadd.f32 %v1623, %v1767
        %v1769 = vpop.f32.mrb[0].mxu0
        %1770 = vdwg.mxu0
        %s1771 = scalar_lea.vmem [#allocation7], 128
        %v1772 = vld [vmem:[%s1771] sm:$0xf]
        %v1773 = vld [vmem:[%s1771 + $0x4] sm:$0xf]
        %v1774 = vld [vmem:[%s1771 + $0x8] sm:$0xf]
        %v1775 = vld [vmem:[%s1771 + $0xc] sm:$0xf]
        %v1776 = vld [vmem:[%s1771 + $0x10] sm:$0xf]
        %v1777 = vld [vmem:[%s1771 + $0x14] sm:$0xf]
        %v1778 = vld [vmem:[%s1771 + $0x18] sm:$0xf]
        %v1779 = vld [vmem:[%s1771 + $0x1c] sm:$0xf]
        %v1780 = vld [vmem:[%s1771 + $0x20] sm:$0xf]
        %v1781 = vld [vmem:[%s1771 + $0x24] sm:$0xf]
        %v1782 = vld [vmem:[%s1771 + $0x28] sm:$0xf]
        %v1783 = vld [vmem:[%s1771 + $0x2c] sm:$0xf]
        %v1784 = vld [vmem:[%s1771 + $0x30] sm:$0xf]
        %v1785 = vld [vmem:[%s1771 + $0x34] sm:$0xf]
        %v1786 = vld [vmem:[%s1771 + $0x38] sm:$0xf]
        %v1787 = vld [vmem:[%s1771 + $0x3c] sm:$0xf]
        %v1804 = vunpack.c.l.b16 %v1772
        %v1805 = vunpack.c.l.b16 %v1773
        %v1806 = vunpack.c.l.b16 %v1774
        %v1807 = vunpack.c.l.b16 %v1775
        %v1808 = vunpack.c.l.b16 %v1776
        %v1809 = vunpack.c.l.b16 %v1777
        %v1810 = vunpack.c.l.b16 %v1778
        %v1811 = vunpack.c.l.b16 %v1779
        %v1812 = vunpack.c.l.b16 %v1780
        %v1813 = vunpack.c.l.b16 %v1781
        %v1814 = vunpack.c.l.b16 %v1782
        %v1815 = vunpack.c.l.b16 %v1783
        %v1816 = vunpack.c.l.b16 %v1784
        %v1817 = vunpack.c.l.b16 %v1785
        %v1818 = vunpack.c.l.b16 %v1786
        %v1819 = vunpack.c.l.b16 %v1787
        %v1820 = vpack.c.b16 %v1805, %v1804
        %v1821 = vpack.c.b16 %v1807, %v1806
        %v1822 = vpack.c.b16 %v1809, %v1808
        %v1823 = vpack.c.b16 %v1811, %v1810
        %v1824 = vpack.c.b16 %v1813, %v1812
        %v1825 = vpack.c.b16 %v1815, %v1814
        %v1826 = vpack.c.b16 %v1817, %v1816
        %v1827 = vpack.c.b16 %v1819, %v1818
        %1836 = vmatprep.subr.bf16.mxu0 0
        %1837 = vmatpush1.bf16.msra.mxu0 %v1820
        %1838 = vmatprep.subr.bf16.mxu0 0
        %1839 = vmatpush1.bf16.msra.mxu0 %v1821
        %1840 = vmatprep.subr.bf16.mxu0 0
        %1841 = vmatpush1.bf16.msra.mxu0 %v1822
        %1842 = vmatprep.subr.bf16.mxu0 0
        %1843 = vmatpush1.bf16.msra.mxu0 %v1823
        %1844 = vmatprep.subr.bf16.mxu0 0
        %1845 = vmatpush1.bf16.msra.mxu0 %v1824
        %1846 = vmatprep.subr.bf16.mxu0 0
        %1847 = vmatpush1.bf16.msra.mxu0 %v1825
        %1848 = vmatprep.subr.bf16.mxu0 0
        %1849 = vmatpush1.bf16.msra.mxu0 %v1826
        %1850 = vmatprep.subr.bf16.mxu0 0
        %1851 = vmatpush1.bf16.msra.mxu0 %v1827
        %1852 = vmatprep.subr.bf16.mxu0 0
        %1853 = vmatpush1.bf16.msra.mxu0 0
        %1854 = vmatprep.subr.bf16.mxu0 0
        %1855 = vmatpush1.bf16.msra.mxu0 0
        %1856 = vmatprep.subr.bf16.mxu0 0
        %1857 = vmatpush1.bf16.msra.mxu0 0
        %1858 = vmatprep.subr.bf16.mxu0 0
        %1859 = vmatpush1.bf16.msra.mxu0 0
        %1860 = vmatprep.subr.bf16.mxu0 0
        %1861 = vmatpush1.bf16.msra.mxu0 0
        %1862 = vmatprep.subr.bf16.mxu0 0
        %1863 = vmatpush1.bf16.msra.mxu0 0
        %1864 = vmatprep.subr.bf16.mxu0 0
        %1865 = vmatpush1.bf16.msra.mxu0 0
        %1866 = vmatprep.subr.bf16.mxu0 0
        %1867 = vmatpush1.bf16.msra.mxu0 0
        %1868 = vmatprep.mubr.bf16.mxu0 0
        %1869 = vmatmul.mubr.bf16.gmra.mrb[0].mxu0 %v1440
        %v1870 = vpop.f32.mrb[0].mxu0
        %v1871 = vadd.f32 0.0, %v1870
        %v1872 = vpop.f32.mrb[0].mxu0
        %v1873 = vpop.f32.mrb[0].mxu0
        %v1874 = vadd.f32 0.0, %v1873
        %v1875 = vpop.f32.mrb[0].mxu0
        %1876 = vmatprep.mubr.bf16.mxu0 0
        %1877 = vmatmul.mubr.bf16.gmra.mrb[0].mxu0 %v1441
        %v1878 = vpop.f32.mrb[0].mxu0
        %v1879 = vadd.f32 0.0, %v1878
        %v1880 = vpop.f32.mrb[0].mxu0
        %v1881 = vpop.f32.mrb[0].mxu0
        %v1882 = vadd.f32 0.0, %v1881
        %v1883 = vpop.f32.mrb[0].mxu0
        %1884 = vmatprep.mubr.bf16.mxu0 0
        %1885 = vmatmul.mubr.bf16.gmra.mrb[0].mxu0 %v1442
        %v1886 = vpop.f32.mrb[0].mxu0
        %v1887 = vadd.f32 0.0, %v1886
        %v1888 = vpop.f32.mrb[0].mxu0
        %v1889 = vpop.f32.mrb[0].mxu0
        %v1890 = vadd.f32 0.0, %v1889
        %v1891 = vpop.f32.mrb[0].mxu0
        %1892 = vmatprep.mubr.bf16.mxu0 0
        %1893 = vmatmul.mubr.bf16.gmra.mrb[0].mxu0 %v1443
        %v1894 = vpop.f32.mrb[0].mxu0
        %v1895 = vadd.f32 0.0, %v1894
        %v1896 = vpop.f32.mrb[0].mxu0
        %v1897 = vpop.f32.mrb[0].mxu0
        %v1898 = vadd.f32 0.0, %v1897
        %v1899 = vpop.f32.mrb[0].mxu0
        %1900 = vmatprep.mubr.bf16.mxu0 0
        %1901 = vmatmul.mubr.bf16.gmra.mrb[0].mxu0 %v1444
        %v1902 = vpop.f32.mrb[0].mxu0
        %v1903 = vadd.f32 0.0, %v1902
        %v1904 = vpop.f32.mrb[0].mxu0
        %v1905 = vpop.f32.mrb[0].mxu0
        %v1906 = vadd.f32 0.0, %v1905
        %v1907 = vpop.f32.mrb[0].mxu0
        %1908 = vmatprep.mubr.bf16.mxu0 0
        %1909 = vmatmul.mubr.bf16.gmra.mrb[0].mxu0 %v1445
        %v1910 = vpop.f32.mrb[0].mxu0
        %v1911 = vadd.f32 0.0, %v1910
        %v1912 = vpop.f32.mrb[0].mxu0
        %v1913 = vpop.f32.mrb[0].mxu0
        %v1914 = vadd.f32 0.0, %v1913
        %v1915 = vpop.f32.mrb[0].mxu0
        %1916 = vmatprep.mubr.bf16.mxu0 0
        %1917 = vmatmul.mubr.bf16.gmra.mrb[0].mxu0 %v1446
        %v1918 = vpop.f32.mrb[0].mxu0
        %v1919 = vadd.f32 0.0, %v1918
        %v1920 = vpop.f32.mrb[0].mxu0
        %v1921 = vpop.f32.mrb[0].mxu0
        %v1922 = vadd.f32 0.0, %v1921
        %v1923 = vpop.f32.mrb[0].mxu0
        %1924 = vmatprep.mubr.bf16.mxu0 0
        %1925 = vmatmul.mubr.bf16.gmra.mrb[0].mxu0 %v1447
        %v1926 = vpop.f32.mrb[0].mxu0
        %v1927 = vadd.f32 0.0, %v1926
        %v1928 = vpop.f32.mrb[0].mxu0
        %v1929 = vpop.f32.mrb[0].mxu0
        %v1930 = vadd.f32 0.0, %v1929
        %v1931 = vpop.f32.mrb[0].mxu0
        %1932 = vdwg.mxu0
        %v1933 = vadd.f32 %v1709, %v1871
        %v1934 = vadd.f32 %v1712, %v1874
        %v1935 = vadd.f32 %v1717, %v1879
        %v1936 = vadd.f32 %v1720, %v1882
        %v1937 = vadd.f32 %v1725, %v1887
        %v1938 = vadd.f32 %v1728, %v1890
        %v1939 = vadd.f32 %v1733, %v1895
        %v1940 = vadd.f32 %v1736, %v1898
        %v1941 = vadd.f32 %v1741, %v1903
        %v1942 = vadd.f32 %v1744, %v1906
        %v1943 = vadd.f32 %v1749, %v1911
        %v1944 = vadd.f32 %v1752, %v1914
        %v1945 = vadd.f32 %v1757, %v1919
        %v1946 = vadd.f32 %v1760, %v1922
        %v1947 = vadd.f32 %v1765, %v1927
        %v1948 = vadd.f32 %v1768, %v1930
        %v1949 = vld [vmem:[%s4] sm:$0x1]
        %v1951 = vlaneseq
        %v1952 = vshrl.u32 %v1951, 7
        %v1953 = vsub.s32 0, %v1952
        %v1954 = vrot.slane %v1949, %v1953
        %v1956 = vadd.f32 %v1933, %v1954
        %v1957 = vadd.f32 %v1934, %v1954
        %v1958 = vadd.f32 %v1935, %v1954
        %v1959 = vadd.f32 %v1936, %v1954
        %v1960 = vadd.f32 %v1937, %v1954
        %v1961 = vadd.f32 %v1938, %v1954
        %v1962 = vadd.f32 %v1939, %v1954
        %v1963 = vadd.f32 %v1940, %v1954
        %v1964 = vadd.f32 %v1941, %v1954
        %v1965 = vadd.f32 %v1942, %v1954
        %v1966 = vadd.f32 %v1943, %v1954
        %v1967 = vadd.f32 %v1944, %v1954
        %v1968 = vadd.f32 %v1945, %v1954
        %v1969 = vadd.f32 %v1946, %v1954
        %v1970 = vadd.f32 %v1947, %v1954
        %v1971 = vadd.f32 %v1948, %v1954
        %v1972 = vmax.f32 %v1956, 0.0
        %v1973 = vmax.f32 %v1957, 0.0
        %v1974 = vmax.f32 %v1958, 0.0
        %v1975 = vmax.f32 %v1959, 0.0
        %v1976 = vmax.f32 %v1960, 0.0
        %v1977 = vmax.f32 %v1961, 0.0
        %v1978 = vmax.f32 %v1962, 0.0
        %v1979 = vmax.f32 %v1963, 0.0
        %v1980 = vmax.f32 %v1964, 0.0
        %v1981 = vmax.f32 %v1965, 0.0
        %v1982 = vmax.f32 %v1966, 0.0
        %v1983 = vmax.f32 %v1967, 0.0
        %v1984 = vmax.f32 %v1968, 0.0
        %v1985 = vmax.f32 %v1969, 0.0
        %v1986 = vmax.f32 %v1970, 0.0
        %v1987 = vmax.f32 %v1971, 0.0
        %v1988 = vadd.f32 %v1972, %v277
        %v1989 = vadd.f32 %v1973, %v278
        %v1990 = vadd.f32 %v1974, %v279
        %v1991 = vadd.f32 %v1975, %v280
        %v1992 = vadd.f32 %v1976, %v281
        %v1993 = vadd.f32 %v1977, %v282
        %v1994 = vadd.f32 %v1978, %v283
        %v1995 = vadd.f32 %v1979, %v284
        %v1996 = vadd.f32 %v1980, %v285
        %v1997 = vadd.f32 %v1981, %v286
        %v1998 = vadd.f32 %v1982, %v287
        %v1999 = vadd.f32 %v1983, %v288
        %v2000 = vadd.f32 %v1984, %v289
        %v2001 = vadd.f32 %v1985, %v290
        %v2002 = vadd.f32 %v1986, %v291
        %v2003 = vadd.f32 %v1987, %v292
        %2004 = vst [vmem:[%s271] sm:$0xff] %v1988
        %2005 = vst [vmem:[%s271 + $0x8] sm:$0xff] %v1989
        %2006 = vst [vmem:[%s271 + $0x10] sm:$0xff] %v1990
        %2007 = vst [vmem:[%s271 + $0x18] sm:$0xff] %v1991
        %2008 = vst [vmem:[%s271 + $0x20] sm:$0xff] %v1992
        %2009 = vst [vmem:[%s271 + $0x28] sm:$0xff] %v1993
        %2010 = vst [vmem:[%s271 + $0x30] sm:$0xff] %v1994
        %2011 = vst [vmem:[%s271 + $0x38] sm:$0xff] %v1995
        %2012 = vst [vmem:[%s271 + $0x40] sm:$0xff] %v1996
        %2013 = vst [vmem:[%s271 + $0x48] sm:$0xff] %v1997
        %2014 = vst [vmem:[%s271 + $0x50] sm:$0xff] %v1998
        %2015 = vst [vmem:[%s271 + $0x58] sm:$0xff] %v1999
        %2016 = vst [vmem:[%s271 + $0x60] sm:$0xff] %v2000
        %2017 = vst [vmem:[%s271 + $0x68] sm:$0xff] %v2001
        %2018 = vst [vmem:[%s271 + $0x70] sm:$0xff] %v2002
        %2019 = vst [vmem:[%s271 + $0x78] sm:$0xff] %v2003
        %s2020 = sand.u32 %s141, 1
        %s2021 = scalar_lea.sflag [#allocation4], %s2020
        %s2022 = sand.u32 %s141, 1
        %s2023 = smul.addr %s2022, 128
        %s2024 = scalar_lea.vmem [#allocation8], %s2023
        // Predicated region
        $region53: #{tpu_custom_call.1} parent=39 // pred_check
          %p2025 = pneg %p151
        $region54: #{tpu_custom_call.1} parent=39 // pred_check_branch
          %2027 = sbr.rel (%p2025) target = $region56
        $region55: #{tpu_custom_call.1} parent=39 // pred_region
          %s2028 = smul.u32 16, %s23
          %s2030 = ssub.s32 2048, 2048
          %2031 = vsyncadd %s2021, %s2030
          %s2032 = smul.addr %s2028, 128
          %s2033 = scalar_lea.hbm %s5, %s2032
          %s2034 = sshll.u32 %s2024, 4
          %s2035 = int_to_ptr.vmem [resolvable:$true] %s2034
          %2040 = dma.vmem_to_hbm [thread:$0]  %s2035, 2048, %s2033, %s2021, 128, 128, 8
        $region56: #{tpu_custom_call.1} parent=39 // pred_fallthru
          _
      $region40: #{tpu_custom_call.1} parent=5 // pred_fallthru
        _
      %p2041 = scmp.le.s32.totalorder 2, %s18
      // Predicated region
      $region57: #{tpu_custom_call.1} parent=5 // pred_check
        %p2042 = pneg %p2041
      $region58: #{tpu_custom_call.1} parent=5 // pred_check_branch
        %2044 = sbr.rel (%p2042) target = $region60
      $region59: #{tpu_custom_call.1} parent=5 // pred_region
        %s2045 = ssub.s32 %s18, 2
        // Predicated region
        $region61: #{tpu_custom_call.1} parent=59 // pred_check
          %p2046 = pneg %p157
        $region62: #{tpu_custom_call.1} parent=59 // pred_check_branch
          %2048 = sbr.rel (%p2046) target = $region64
        $region63: #{tpu_custom_call.1} parent=59 // pred_region
          %s2049 = sand.u32 %s142, 1
          %s2050 = scalar_lea.sflag [#allocation4], %s2049
          %s2051 = sand.u32 %s142, 1
          %s2052 = smul.addr %s2051, 128
          %s2053 = scalar_lea.vmem [#allocation8], %s2052
          %2054 = dma.done %s2050, 2048
        $region64: #{tpu_custom_call.1} parent=59 // pred_fallthru
          _
      $region60: #{tpu_custom_call.1} parent=5 // pred_fallthru
        _
    $region6: #{tpu_custom_call.1} parent=1 // loop_footer
      %s22 = sadd.s32 1, %s18
    $region7: #{tpu_custom_call.1} parent=1 // loop_footer_branch
      %17 = sbr.rel target = $region3
    $region8: #{tpu_custom_call.1} parent=1 // loop_exit
      _
    %2055 = vsyncpa [#allocation3], 1
    %s2056 = scalar_lea.sflag [#allocation3], 1
    %2057 = vsyncpa %s2056, 1
    %2058 = vsyncpa [#allocation6], 1
    %2059 = vsyncpa [#allocation4], 1
    %s2060 = scalar_lea.sflag [#allocation4], 1
    %2061 = vsyncpa %s2060, 1

</llo_original>
